<compile_context>
chip_gen: v7x
topology: tpu7x:2x2x1
jax: 0.10.0
libtpu: 0.0.40
codegen_flags: <defaults>
</compile_context>

<pallas_src>
import functools

import jax
import jax.numpy as jnp
from jax import lax
from jax.experimental import pallas as pl
from jax.experimental.pallas import tpu as pltpu


def _round_up(x, m):
    return (x + m - 1) // m * m


def _lstm_kernel(seq_len, needs_mask,
                 gx_ref, whh_hbm, wlin_hbm, blin_ref,      # inputs
                 out_ref,                                   # output
                 h_ref, c_ref, whh_vmem, wlin_vmem, dma_sems):  # scratch
    blk = pl.program_id(0)
    t_blk = gx_ref.shape[0]
    bp, hp = h_ref.shape

    @pl.when(blk == 0)
    def _():
        # One-time: zero the carried state and stage loop-invariant weights
        # into single-buffered VMEM scratch (persists across grid steps).
        h_ref[...] = jnp.zeros_like(h_ref)
        c_ref[...] = jnp.zeros_like(c_ref)
        cp_whh = pltpu.make_async_copy(whh_hbm, whh_vmem, dma_sems.at[0])
        cp_wlin = pltpu.make_async_copy(wlin_hbm, wlin_vmem, dma_sems.at[1])
        cp_whh.start()
        cp_wlin.start()
        cp_whh.wait()
        cp_wlin.wait()

    def step(tt, carry):
        h, c = carry
        # Recurrent matmul on the MXU: bf16 inputs, f32 accumulate.
        gates = gx_ref[tt] + jnp.dot(
            h.astype(whh_vmem.dtype), whh_vmem[...],
            preferred_element_type=jnp.float32)
        # Gate order is [i, f, o, g] -> one contiguous sigmoid over 3*hp lanes.
        sig = jax.nn.sigmoid(gates[:, : 3 * hp])
        i_g = sig[:, 0 * hp:1 * hp]
        f_g = sig[:, 1 * hp:2 * hp]
        o_g = sig[:, 2 * hp:3 * hp]
        g_g = jnp.tanh(gates[:, 3 * hp:4 * hp])
        c_new = f_g * c + i_g * g_g
        h_new = o_g * jnp.tanh(c_new)
        if needs_mask:  # static python bool: only emitted if seq was padded
            valid = (blk * t_blk + tt) < seq_len
            c_new = jnp.where(valid, c_new, c)
            h_new = jnp.where(valid, h_new, h)
        return h_new, c_new

    h, c = lax.fori_loop(0, t_blk, step, (h_ref[...], c_ref[...]), unroll=True)
    h_ref[...] = h
    c_ref[...] = c

    @pl.when(blk == pl.num_programs(0) - 1)
    def _():
        # Fused final Linear on the last hidden state (f32, tiny).
        out_ref[...] = (jnp.dot(h, wlin_vmem[...],
                                preferred_element_type=jnp.float32)
                        + blin_ref[...]).astype(out_ref.dtype)


@functools.partial(jax.jit, static_argnames=("t_blk",))
def lstm_forward(x, w_ih, w_hh, b_ih, b_hh, w_lin, b_lin, t_blk=8):
    """x: (seq, batch, input_size) f32.  Returns (batch, output_size) f32."""
    seq_len, batch, in_sz = x.shape
    hidden = w_hh.shape[1]
    out_sz = w_lin.shape[0]

    hp = _round_up(hidden, 128)          # padded hidden size (lanes)
    bp = _round_up(max(batch, 1), 8)     # padded batch size (sublanes)
    seq_pad = _round_up(seq_len, t_blk)  # padded sequence length
    n_blk = seq_pad // t_blk
    needs_mask = seq_pad != seq_len

    f32 = jnp.float32
    perm = jnp.array([0, 1, 3, 2])       # torch [i,f,g,o] -> kernel [i,f,o,g]

    def prep_gate_mat(w, in_dim):
        # w: (4*hidden, in_dim) -> (in_dim, 4*hp), gate-reordered, hp-padded.
        w4 = w.astype(f32).reshape(4, hidden, in_dim)[perm]
        wp = jnp.zeros((4, hp, in_dim), f32).at[:, :hidden, :].set(w4)
        return wp.reshape(4 * hp, in_dim).T

    wih_t = prep_gate_mat(w_ih, in_sz)                        # (in_sz, 4*hp)
    whh_t = prep_gate_mat(w_hh, hidden)                       # (hidden, 4*hp)
    whh_p = jnp.zeros((hp, 4 * hp), f32).at[:hidden, :].set(whh_t)
    whh_p = whh_p.astype(jnp.bfloat16)                        # bf16 MXU weights

    b4 = (b_ih + b_hh).astype(f32).reshape(4, hidden)[perm]
    b_row = jnp.zeros((4, hp), f32).at[:, :hidden].set(b4).reshape(4 * hp)

    wlin_t = jnp.zeros((hp, out_sz), f32).at[:hidden, :].set(w_lin.astype(f32).T)
    blin = b_lin.reshape(1, out_sz).astype(f32)

    # ---- Hoisted input projection: one big MXU-friendly matmul in XLA. ----
    x2 = x.astype(f32).reshape(seq_len * batch, in_sz)
    gates_x = jnp.dot(x2, wih_t, preferred_element_type=f32) + b_row
    gates_x = gates_x.reshape(seq_len, batch, 4 * hp)
    gx = jnp.zeros((seq_pad, bp, 4 * hp), f32)
    gx = gx.at[:seq_len, :batch, :].set(gates_x)

    grid_spec = pltpu.PrefetchScalarGridSpec(
        num_scalar_prefetch=0,
        grid=(n_blk,),
        in_specs=[
            pl.BlockSpec((t_blk, bp, 4 * hp), lambda b: (b, 0, 0)),  # gates_x
            pl.BlockSpec(memory_space=pl.ANY),                       # W_hh^T (HBM)
            pl.BlockSpec(memory_space=pl.ANY),                       # W_lin^T (HBM)
            pl.BlockSpec((1, out_sz), lambda b: (0, 0)),             # b_lin
        ],
        out_specs=pl.BlockSpec((bp, out_sz), lambda b: (0, 0)),
        scratch_shapes=[
            pltpu.VMEM((bp, hp), jnp.float32),          # h
            pltpu.VMEM((bp, hp), jnp.float32),          # c
            pltpu.VMEM((hp, 4 * hp), jnp.bfloat16),     # W_hh^T (single-buffered)
            pltpu.VMEM((hp, out_sz), jnp.float32),      # W_lin^T
            pltpu.SemaphoreType.DMA((2,)),
        ],
    )

    out_p = pl.pallas_call(
        functools.partial(_lstm_kernel, seq_len, needs_mask),
        out_shape=jax.ShapeDtypeStruct((bp, out_sz), f32),
        grid_spec=grid_spec,
        compiler_params=pltpu.CompilerParams(
            dimension_semantics=("arbitrary",),   # time axis is sequential
            vmem_limit_bytes=32 * 1024 * 1024,
        ),
    )(gx, whh_p, wlin_t, blin)

    return out_p[:batch]


def lstm_reference(x, w_ih, w_hh, b_ih, b_hh, w_lin, b_lin):
    """Pure-JAX f32 reference mirroring torch nn.LSTM + nn.Linear."""
    hidden = w_hh.shape[1]
    batch = x.shape[1]

    def step(carry, xt):
        h, c = carry
        g = xt @ w_ih.T + b_ih + h @ w_hh.T + b_hh
        i, f, gg, o = jnp.split(g, 4, axis=-1)
        i = jax.nn.sigmoid(i)
        f = jax.nn.sigmoid(f)
        gg = jnp.tanh(gg)
        o = jax.nn.sigmoid(o)
        c = f * c + i * gg
        h = o * jnp.tanh(c)
        return (h, c), None

    h0 = jnp.zeros((batch, hidden), jnp.float32)
    c0 = jnp.zeros((batch, hidden), jnp.float32)
    (h, _), _ = jax.lax.scan(step, (h0, c0), x)
    return h @ w_lin.T + b_lin


if __name__ == "__main__":
    # Module defaults: input_size=1, hidden_layer_size=100, output_size=1.
    input_size, hidden, output_size = 1, 100, 1
    seq_len, batch = 10, 2   # seq not a multiple of T_BLK -> exercises masking

    key = jax.random.PRNGKey(0)
    k = jax.random.split(key, 8)
    stdv = 1.0 / (hidden ** 0.5)

    def u(kk, shape):
        return jax.random.uniform(kk, shape, jnp.float32, -stdv, stdv)

    # nn.LSTM parameter shapes (single layer): weight_ih (4H, in), weight_hh
    # (4H, H), bias_ih (4H,), bias_hh (4H,).  nn.Linear: weight (out, H), bias (out,).
    w_ih = u(k[0], (4 * hidden, input_size))
    w_hh = u(k[1], (4 * hidden, hidden))
    b_ih = u(k[2], (4 * hidden,))
    b_hh = u(k[3], (4 * hidden,))
    w_lin = u(k[4], (output_size, hidden))
    b_lin = u(k[5], (output_size,))

    x = jax.random.normal(k[6], (seq_len, batch, input_size), jnp.float32)

    out = lstm_forward(x, w_ih, w_hh, b_ih, b_hh, w_lin, b_lin)
    out = jax.block_until_ready(out)

    ref = lstm_reference(x, w_ih, w_hh, b_ih, b_hh, w_lin, b_lin)
    assert out.shape == (batch, output_size)
    # Recurrent matmul runs in bf16 (f32 accumulate) on the MXU -> compare
    # against the pure-f32 reference with a correspondingly relaxed tolerance.
    assert jnp.allclose(out, ref, atol=1e-2, rtol=1e-2), (out, ref)

    print("KERNEL_OK")
</pallas_src>

<mosaic_0001>
module attributes {stable_mosaic.version = 11 : i64} {
  func.func @_lstm_kernel(%arg0: i32, %arg1: memref<8x8x512xf32, #tpu.memory_space<vmem>>, %arg2: memref<128x512xbf16, #tpu.memory_space<any>>, %arg3: memref<128x1xf32, #tpu.memory_space<any>>, %arg4: memref<1x1xf32, #tpu.memory_space<vmem>>, %arg5: memref<8x1xf32, #tpu.memory_space<vmem>>, %arg6: memref<8x128xf32, #tpu.memory_space<vmem>>, %arg7: memref<8x128xf32, #tpu.memory_space<vmem>>, %arg8: memref<128x512xbf16, #tpu.memory_space<vmem>>, %arg9: memref<128x1xf32, #tpu.memory_space<vmem>>, %arg10: memref<2x!tpu.dma_semaphore, #tpu.memory_space<semaphore_mem>>) attributes {dimension_semantics = [#tpu.dimension_semantics<arbitrary>], iteration_bounds = array<i64: 2>, scalar_prefetch = 0 : i64, scratch_operands = 5 : i64, tpu.core_type = #tpu.core_type<tc>, window_params = [{transform_indices = @transform_0, window_bounds = array<i64: 8, 8, 512>}, {}, {}, {pipeline_mode = #tpu.pipeline_mode<synchronous>, transform_indices = @transform_3, window_bounds = array<i64: 1, 1>}, {pipeline_mode = #tpu.pipeline_mode<synchronous>, transform_indices = @transform_4, window_bounds = array<i64: 8, 1>}]} {
    %c0_i32 = arith.constant 0 : i32
    %0 = arith.cmpi eq, %arg0, %c0_i32 : i32
    %1 = arith.extui %0 : i1 to i32
    %c0_i32_0 = arith.constant 0 : i32
    %2 = arith.cmpi ne, %1, %c0_i32_0 : i32
    scf.if %2 {
      %cst_73 = arith.constant 0.000000e+00 : f32
      %234 = vector.broadcast %cst_73 : f32 to vector<8x128xf32>
      %c0_74 = arith.constant 0 : index
      %c0_75 = arith.constant 0 : index
      %235 = vector.load %arg6[%c0_74, %c0_75] : memref<8x128xf32, #tpu.memory_space<vmem>>, vector<8x128xf32>
      tpu.vector_store %arg6[%c0_74, %c0_75], %234 {strides = array<i32>} : memref<8x128xf32, #tpu.memory_space<vmem>>, vector<8x128xf32>,
      %cst_76 = arith.constant 0.000000e+00 : f32
      %236 = vector.broadcast %cst_76 : f32 to vector<8x128xf32>
      %c0_77 = arith.constant 0 : index
      %c0_78 = arith.constant 0 : index
      %237 = vector.load %arg7[%c0_77, %c0_78] : memref<8x128xf32, #tpu.memory_space<vmem>>, vector<8x128xf32>
      tpu.vector_store %arg7[%c0_77, %c0_78], %236 {strides = array<i32>} : memref<8x128xf32, #tpu.memory_space<vmem>>, vector<8x128xf32>,
      %c0_i32_79 = arith.constant 0 : i32
      %238 = tpu.memref_slice %arg10[%c0_i32_79] : memref<2x!tpu.dma_semaphore, #tpu.memory_space<semaphore_mem>> -> memref<1x!tpu.dma_semaphore, #tpu.memory_space<semaphore_mem>>
      %239 = tpu.memref_squeeze %238 : memref<1x!tpu.dma_semaphore, #tpu.memory_space<semaphore_mem>> -> memref<!tpu.dma_semaphore, #tpu.memory_space<semaphore_mem>>
      tpu.enqueue_dma source(%arg2 : memref<128x512xbf16, #tpu.memory_space<any>>) target(%arg8 : memref<128x512xbf16, #tpu.memory_space<vmem>>) target_semaphore(%239 : memref<!tpu.dma_semaphore, #tpu.memory_space<semaphore_mem>>)
      %c1_i32_80 = arith.constant 1 : i32
      %240 = tpu.memref_slice %arg10[%c1_i32_80] : memref<2x!tpu.dma_semaphore, #tpu.memory_space<semaphore_mem>> -> memref<1x!tpu.dma_semaphore, #tpu.memory_space<semaphore_mem>>
      %241 = tpu.memref_squeeze %240 : memref<1x!tpu.dma_semaphore, #tpu.memory_space<semaphore_mem>> -> memref<!tpu.dma_semaphore, #tpu.memory_space<semaphore_mem>>
      tpu.enqueue_dma source(%arg3 : memref<128x1xf32, #tpu.memory_space<any>>) target(%arg9 : memref<128x1xf32, #tpu.memory_space<vmem>>) target_semaphore(%241 : memref<!tpu.dma_semaphore, #tpu.memory_space<semaphore_mem>>)
      %c0_i32_81 = arith.constant 0 : i32
      %242 = tpu.memref_slice %arg10[%c0_i32_81] : memref<2x!tpu.dma_semaphore, #tpu.memory_space<semaphore_mem>> -> memref<1x!tpu.dma_semaphore, #tpu.memory_space<semaphore_mem>>
      %243 = tpu.memref_squeeze %242 : memref<1x!tpu.dma_semaphore, #tpu.memory_space<semaphore_mem>> -> memref<!tpu.dma_semaphore, #tpu.memory_space<semaphore_mem>>
      tpu.wait_dma2 semaphore(%243 : memref<!tpu.dma_semaphore, #tpu.memory_space<semaphore_mem>>) src(%arg2 : memref<128x512xbf16, #tpu.memory_space<any>>) dst(%arg8 : memref<128x512xbf16, #tpu.memory_space<vmem>>)
      %c1_i32_82 = arith.constant 1 : i32
      %244 = tpu.memref_slice %arg10[%c1_i32_82] : memref<2x!tpu.dma_semaphore, #tpu.memory_space<semaphore_mem>> -> memref<1x!tpu.dma_semaphore, #tpu.memory_space<semaphore_mem>>
      %245 = tpu.memref_squeeze %244 : memref<1x!tpu.dma_semaphore, #tpu.memory_space<semaphore_mem>> -> memref<!tpu.dma_semaphore, #tpu.memory_space<semaphore_mem>>
      tpu.wait_dma2 semaphore(%245 : memref<!tpu.dma_semaphore, #tpu.memory_space<semaphore_mem>>) src(%arg3 : memref<128x1xf32, #tpu.memory_space<any>>) dst(%arg9 : memref<128x1xf32, #tpu.memory_space<vmem>>)
    } else {
    }
    %c0 = arith.constant 0 : index
    %c0_1 = arith.constant 0 : index
    %3 = vector.load %arg6[%c0, %c0_1] : memref<8x128xf32, #tpu.memory_space<vmem>>, vector<8x128xf32>
    %c0_2 = arith.constant 0 : index
    %c0_3 = arith.constant 0 : index
    %4 = vector.load %arg7[%c0_2, %c0_3] : memref<8x128xf32, #tpu.memory_space<vmem>>, vector<8x128xf32>
    %c0_i32_4 = arith.constant 0 : i32
    %5 = arith.index_cast %c0_i32_4 : i32 to index
    %c0_5 = arith.constant 0 : index
    %c0_6 = arith.constant 0 : index
    %6 = vector.load %arg1[%5, %c0_5, %c0_6] : memref<8x8x512xf32, #tpu.memory_space<vmem>>, vector<1x8x512xf32>
    %7 = vector.shape_cast %6 : vector<1x8x512xf32> to vector<8x512xf32>
    %8 = arith.truncf %3 : vector<8x128xf32> to vector<8x128xbf16>
    %c0_7 = arith.constant 0 : index
    %c0_8 = arith.constant 0 : index
    %9 = vector.load %arg8[%c0_7, %c0_8] : memref<128x512xbf16, #tpu.memory_space<vmem>>, vector<128x512xbf16>
    %cst = arith.constant dense<0.000000e+00> : vector<8x512xf32>
    %10 = tpu.matmul %8, %9, %cst {dimension_numbers = #tpu.dot_dimension_numbers<[1], [0], [0], [1], [0, 0, 1, 1], [], []>} : vector<8x128xbf16>, vector<128x512xbf16>, vector<8x512xf32> -> vector<8x512xf32>
    %11 = arith.addf %7, %10 : vector<8x512xf32>
    %12 = vector.extract_strided_slice %11 {offsets = [0, 0], sizes = [8, 384], strides = [1, 1]} : vector<8x512xf32> to vector<8x384xf32>
    %13 = arith.negf %12 : vector<8x384xf32>
    %14 = math.exp %13 : vector<8x384xf32>
    %cst_9 = arith.constant 1.000000e+00 : f32
    %15 = vector.broadcast %cst_9 : f32 to vector<8x384xf32>
    %16 = arith.addf %15, %14 : vector<8x384xf32>
    %17 = arith.divf %15, %16 : vector<8x384xf32>
    %18 = vector.extract_strided_slice %17 {offsets = [0, 0], sizes = [8, 128], strides = [1, 1]} : vector<8x384xf32> to vector<8x128xf32>
    %19 = vector.extract_strided_slice %17 {offsets = [0, 128], sizes = [8, 128], strides = [1, 1]} : vector<8x384xf32> to vector<8x128xf32>
    %20 = vector.extract_strided_slice %17 {offsets = [0, 256], sizes = [8, 128], strides = [1, 1]} : vector<8x384xf32> to vector<8x128xf32>
    %21 = vector.extract_strided_slice %11 {offsets = [0, 384], sizes = [8, 128], strides = [1, 1]} : vector<8x512xf32> to vector<8x128xf32>
    %22 = math.tanh %21 : vector<8x128xf32>
    %23 = arith.mulf %19, %4 : vector<8x128xf32>
    %24 = arith.mulf %18, %22 : vector<8x128xf32>
    %25 = arith.addf %23, %24 : vector<8x128xf32>
    %26 = math.tanh %25 : vector<8x128xf32>
    %27 = arith.mulf %20, %26 : vector<8x128xf32>
    %c8_i32 = arith.constant 8 : i32
    %28 = arith.muli %arg0, %c8_i32 : i32
    %29 = arith.addi %28, %c0_i32_4 : i32
    %c10_i32 = arith.constant 10 : i32
    %30 = arith.cmpi slt, %29, %c10_i32 : i32
    %31 = arith.select %30, %25, %4 : vector<8x128xf32>
    %32 = arith.select %30, %27, %3 : vector<8x128xf32>
    %c1_i32 = arith.constant 1 : i32
    %33 = arith.index_cast %c1_i32 : i32 to index
    %c0_10 = arith.constant 0 : index
    %c0_11 = arith.constant 0 : index
    %34 = vector.load %arg1[%33, %c0_10, %c0_11] : memref<8x8x512xf32, #tpu.memory_space<vmem>>, vector<1x8x512xf32>
    %35 = vector.shape_cast %34 : vector<1x8x512xf32> to vector<8x512xf32>
    %36 = arith.truncf %32 : vector<8x128xf32> to vector<8x128xbf16>
    %c0_12 = arith.constant 0 : index
    %c0_13 = arith.constant 0 : index
    %37 = vector.load %arg8[%c0_12, %c0_13] : memref<128x512xbf16, #tpu.memory_space<vmem>>, vector<128x512xbf16>
    %cst_14 = arith.constant dense<0.000000e+00> : vector<8x512xf32>
    %38 = tpu.matmul %36, %37, %cst_14 {dimension_numbers = #tpu.dot_dimension_numbers<[1], [0], [0], [1], [0, 0, 1, 1], [], []>} : vector<8x128xbf16>, vector<128x512xbf16>, vector<8x512xf32> -> vector<8x512xf32>
    %39 = arith.addf %35, %38 : vector<8x512xf32>
    %40 = vector.extract_strided_slice %39 {offsets = [0, 0], sizes = [8, 384], strides = [1, 1]} : vector<8x512xf32> to vector<8x384xf32>
    %41 = arith.negf %40 : vector<8x384xf32>
    %42 = math.exp %41 : vector<8x384xf32>
    %cst_15 = arith.constant 1.000000e+00 : f32
    %43 = vector.broadcast %cst_15 : f32 to vector<8x384xf32>
    %44 = arith.addf %43, %42 : vector<8x384xf32>
    %45 = arith.divf %43, %44 : vector<8x384xf32>
    %46 = vector.extract_strided_slice %45 {offsets = [0, 0], sizes = [8, 128], strides = [1, 1]} : vector<8x384xf32> to vector<8x128xf32>
    %47 = vector.extract_strided_slice %45 {offsets = [0, 128], sizes = [8, 128], strides = [1, 1]} : vector<8x384xf32> to vector<8x128xf32>
    %48 = vector.extract_strided_slice %45 {offsets = [0, 256], sizes = [8, 128], strides = [1, 1]} : vector<8x384xf32> to vector<8x128xf32>
    %49 = vector.extract_strided_slice %39 {offsets = [0, 384], sizes = [8, 128], strides = [1, 1]} : vector<8x512xf32> to vector<8x128xf32>
    %50 = math.tanh %49 : vector<8x128xf32>
    %51 = arith.mulf %47, %31 : vector<8x128xf32>
    %52 = arith.mulf %46, %50 : vector<8x128xf32>
    %53 = arith.addf %51, %52 : vector<8x128xf32>
    %54 = math.tanh %53 : vector<8x128xf32>
    %55 = arith.mulf %48, %54 : vector<8x128xf32>
    %c8_i32_16 = arith.constant 8 : i32
    %56 = arith.muli %arg0, %c8_i32_16 : i32
    %57 = arith.addi %56, %c1_i32 : i32
    %c10_i32_17 = arith.constant 10 : i32
    %58 = arith.cmpi slt, %57, %c10_i32_17 : i32
    %59 = arith.select %58, %53, %31 : vector<8x128xf32>
    %60 = arith.select %58, %55, %32 : vector<8x128xf32>
    %c2_i32 = arith.constant 2 : i32
    %61 = arith.index_cast %c2_i32 : i32 to index
    %c0_18 = arith.constant 0 : index
    %c0_19 = arith.constant 0 : index
    %62 = vector.load %arg1[%61, %c0_18, %c0_19] : memref<8x8x512xf32, #tpu.memory_space<vmem>>, vector<1x8x512xf32>
    %63 = vector.shape_cast %62 : vector<1x8x512xf32> to vector<8x512xf32>
    %64 = arith.truncf %60 : vector<8x128xf32> to vector<8x128xbf16>
    %c0_20 = arith.constant 0 : index
    %c0_21 = arith.constant 0 : index
    %65 = vector.load %arg8[%c0_20, %c0_21] : memref<128x512xbf16, #tpu.memory_space<vmem>>, vector<128x512xbf16>
    %cst_22 = arith.constant dense<0.000000e+00> : vector<8x512xf32>
    %66 = tpu.matmul %64, %65, %cst_22 {dimension_numbers = #tpu.dot_dimension_numbers<[1], [0], [0], [1], [0, 0, 1, 1], [], []>} : vector<8x128xbf16>, vector<128x512xbf16>, vector<8x512xf32> -> vector<8x512xf32>
    %67 = arith.addf %63, %66 : vector<8x512xf32>
    %68 = vector.extract_strided_slice %67 {offsets = [0, 0], sizes = [8, 384], strides = [1, 1]} : vector<8x512xf32> to vector<8x384xf32>
    %69 = arith.negf %68 : vector<8x384xf32>
    %70 = math.exp %69 : vector<8x384xf32>
    %cst_23 = arith.constant 1.000000e+00 : f32
    %71 = vector.broadcast %cst_23 : f32 to vector<8x384xf32>
    %72 = arith.addf %71, %70 : vector<8x384xf32>
    %73 = arith.divf %71, %72 : vector<8x384xf32>
    %74 = vector.extract_strided_slice %73 {offsets = [0, 0], sizes = [8, 128], strides = [1, 1]} : vector<8x384xf32> to vector<8x128xf32>
    %75 = vector.extract_strided_slice %73 {offsets = [0, 128], sizes = [8, 128], strides = [1, 1]} : vector<8x384xf32> to vector<8x128xf32>
    %76 = vector.extract_strided_slice %73 {offsets = [0, 256], sizes = [8, 128], strides = [1, 1]} : vector<8x384xf32> to vector<8x128xf32>
    %77 = vector.extract_strided_slice %67 {offsets = [0, 384], sizes = [8, 128], strides = [1, 1]} : vector<8x512xf32> to vector<8x128xf32>
    %78 = math.tanh %77 : vector<8x128xf32>
    %79 = arith.mulf %75, %59 : vector<8x128xf32>
    %80 = arith.mulf %74, %78 : vector<8x128xf32>
    %81 = arith.addf %79, %80 : vector<8x128xf32>
    %82 = math.tanh %81 : vector<8x128xf32>
    %83 = arith.mulf %76, %82 : vector<8x128xf32>
    %c8_i32_24 = arith.constant 8 : i32
    %84 = arith.muli %arg0, %c8_i32_24 : i32
    %85 = arith.addi %84, %c2_i32 : i32
    %c10_i32_25 = arith.constant 10 : i32
    %86 = arith.cmpi slt, %85, %c10_i32_25 : i32
    %87 = arith.select %86, %81, %59 : vector<8x128xf32>
    %88 = arith.select %86, %83, %60 : vector<8x128xf32>
    %c3_i32 = arith.constant 3 : i32
    %89 = arith.index_cast %c3_i32 : i32 to index
    %c0_26 = arith.constant 0 : index
    %c0_27 = arith.constant 0 : index
    %90 = vector.load %arg1[%89, %c0_26, %c0_27] : memref<8x8x512xf32, #tpu.memory_space<vmem>>, vector<1x8x512xf32>
    %91 = vector.shape_cast %90 : vector<1x8x512xf32> to vector<8x512xf32>
    %92 = arith.truncf %88 : vector<8x128xf32> to vector<8x128xbf16>
    %c0_28 = arith.constant 0 : index
    %c0_29 = arith.constant 0 : index
    %93 = vector.load %arg8[%c0_28, %c0_29] : memref<128x512xbf16, #tpu.memory_space<vmem>>, vector<128x512xbf16>
    %cst_30 = arith.constant dense<0.000000e+00> : vector<8x512xf32>
    %94 = tpu.matmul %92, %93, %cst_30 {dimension_numbers = #tpu.dot_dimension_numbers<[1], [0], [0], [1], [0, 0, 1, 1], [], []>} : vector<8x128xbf16>, vector<128x512xbf16>, vector<8x512xf32> -> vector<8x512xf32>
    %95 = arith.addf %91, %94 : vector<8x512xf32>
    %96 = vector.extract_strided_slice %95 {offsets = [0, 0], sizes = [8, 384], strides = [1, 1]} : vector<8x512xf32> to vector<8x384xf32>
    %97 = arith.negf %96 : vector<8x384xf32>
    %98 = math.exp %97 : vector<8x384xf32>
    %cst_31 = arith.constant 1.000000e+00 : f32
    %99 = vector.broadcast %cst_31 : f32 to vector<8x384xf32>
    %100 = arith.addf %99, %98 : vector<8x384xf32>
    %101 = arith.divf %99, %100 : vector<8x384xf32>
    %102 = vector.extract_strided_slice %101 {offsets = [0, 0], sizes = [8, 128], strides = [1, 1]} : vector<8x384xf32> to vector<8x128xf32>
    %103 = vector.extract_strided_slice %101 {offsets = [0, 128], sizes = [8, 128], strides = [1, 1]} : vector<8x384xf32> to vector<8x128xf32>
    %104 = vector.extract_strided_slice %101 {offsets = [0, 256], sizes = [8, 128], strides = [1, 1]} : vector<8x384xf32> to vector<8x128xf32>
    %105 = vector.extract_strided_slice %95 {offsets = [0, 384], sizes = [8, 128], strides = [1, 1]} : vector<8x512xf32> to vector<8x128xf32>
    %106 = math.tanh %105 : vector<8x128xf32>
    %107 = arith.mulf %103, %87 : vector<8x128xf32>
    %108 = arith.mulf %102, %106 : vector<8x128xf32>
    %109 = arith.addf %107, %108 : vector<8x128xf32>
    %110 = math.tanh %109 : vector<8x128xf32>
    %111 = arith.mulf %104, %110 : vector<8x128xf32>
    %c8_i32_32 = arith.constant 8 : i32
    %112 = arith.muli %arg0, %c8_i32_32 : i32
    %113 = arith.addi %112, %c3_i32 : i32
    %c10_i32_33 = arith.constant 10 : i32
    %114 = arith.cmpi slt, %113, %c10_i32_33 : i32
    %115 = arith.select %114, %109, %87 : vector<8x128xf32>
    %116 = arith.select %114, %111, %88 : vector<8x128xf32>
    %c4_i32 = arith.constant 4 : i32
    %117 = arith.index_cast %c4_i32 : i32 to index
    %c0_34 = arith.constant 0 : index
    %c0_35 = arith.constant 0 : index
    %118 = vector.load %arg1[%117, %c0_34, %c0_35] : memref<8x8x512xf32, #tpu.memory_space<vmem>>, vector<1x8x512xf32>
    %119 = vector.shape_cast %118 : vector<1x8x512xf32> to vector<8x512xf32>
    %120 = arith.truncf %116 : vector<8x128xf32> to vector<8x128xbf16>
    %c0_36 = arith.constant 0 : index
    %c0_37 = arith.constant 0 : index
    %121 = vector.load %arg8[%c0_36, %c0_37] : memref<128x512xbf16, #tpu.memory_space<vmem>>, vector<128x512xbf16>
    %cst_38 = arith.constant dense<0.000000e+00> : vector<8x512xf32>
    %122 = tpu.matmul %120, %121, %cst_38 {dimension_numbers = #tpu.dot_dimension_numbers<[1], [0], [0], [1], [0, 0, 1, 1], [], []>} : vector<8x128xbf16>, vector<128x512xbf16>, vector<8x512xf32> -> vector<8x512xf32>
    %123 = arith.addf %119, %122 : vector<8x512xf32>
    %124 = vector.extract_strided_slice %123 {offsets = [0, 0], sizes = [8, 384], strides = [1, 1]} : vector<8x512xf32> to vector<8x384xf32>
    %125 = arith.negf %124 : vector<8x384xf32>
    %126 = math.exp %125 : vector<8x384xf32>
    %cst_39 = arith.constant 1.000000e+00 : f32
    %127 = vector.broadcast %cst_39 : f32 to vector<8x384xf32>
    %128 = arith.addf %127, %126 : vector<8x384xf32>
    %129 = arith.divf %127, %128 : vector<8x384xf32>
    %130 = vector.extract_strided_slice %129 {offsets = [0, 0], sizes = [8, 128], strides = [1, 1]} : vector<8x384xf32> to vector<8x128xf32>
    %131 = vector.extract_strided_slice %129 {offsets = [0, 128], sizes = [8, 128], strides = [1, 1]} : vector<8x384xf32> to vector<8x128xf32>
    %132 = vector.extract_strided_slice %129 {offsets = [0, 256], sizes = [8, 128], strides = [1, 1]} : vector<8x384xf32> to vector<8x128xf32>
    %133 = vector.extract_strided_slice %123 {offsets = [0, 384], sizes = [8, 128], strides = [1, 1]} : vector<8x512xf32> to vector<8x128xf32>
    %134 = math.tanh %133 : vector<8x128xf32>
    %135 = arith.mulf %131, %115 : vector<8x128xf32>
    %136 = arith.mulf %130, %134 : vector<8x128xf32>
    %137 = arith.addf %135, %136 : vector<8x128xf32>
    %138 = math.tanh %137 : vector<8x128xf32>
    %139 = arith.mulf %132, %138 : vector<8x128xf32>
    %c8_i32_40 = arith.constant 8 : i32
    %140 = arith.muli %arg0, %c8_i32_40 : i32
    %141 = arith.addi %140, %c4_i32 : i32
    %c10_i32_41 = arith.constant 10 : i32
    %142 = arith.cmpi slt, %141, %c10_i32_41 : i32
    %143 = arith.select %142, %137, %115 : vector<8x128xf32>
    %144 = arith.select %142, %139, %116 : vector<8x128xf32>
    %c5_i32 = arith.constant 5 : i32
    %145 = arith.index_cast %c5_i32 : i32 to index
    %c0_42 = arith.constant 0 : index
    %c0_43 = arith.constant 0 : index
    %146 = vector.load %arg1[%145, %c0_42, %c0_43] : memref<8x8x512xf32, #tpu.memory_space<vmem>>, vector<1x8x512xf32>
    %147 = vector.shape_cast %146 : vector<1x8x512xf32> to vector<8x512xf32>
    %148 = arith.truncf %144 : vector<8x128xf32> to vector<8x128xbf16>
    %c0_44 = arith.constant 0 : index
    %c0_45 = arith.constant 0 : index
    %149 = vector.load %arg8[%c0_44, %c0_45] : memref<128x512xbf16, #tpu.memory_space<vmem>>, vector<128x512xbf16>
    %cst_46 = arith.constant dense<0.000000e+00> : vector<8x512xf32>
    %150 = tpu.matmul %148, %149, %cst_46 {dimension_numbers = #tpu.dot_dimension_numbers<[1], [0], [0], [1], [0, 0, 1, 1], [], []>} : vector<8x128xbf16>, vector<128x512xbf16>, vector<8x512xf32> -> vector<8x512xf32>
    %151 = arith.addf %147, %150 : vector<8x512xf32>
    %152 = vector.extract_strided_slice %151 {offsets = [0, 0], sizes = [8, 384], strides = [1, 1]} : vector<8x512xf32> to vector<8x384xf32>
    %153 = arith.negf %152 : vector<8x384xf32>
    %154 = math.exp %153 : vector<8x384xf32>
    %cst_47 = arith.constant 1.000000e+00 : f32
    %155 = vector.broadcast %cst_47 : f32 to vector<8x384xf32>
    %156 = arith.addf %155, %154 : vector<8x384xf32>
    %157 = arith.divf %155, %156 : vector<8x384xf32>
    %158 = vector.extract_strided_slice %157 {offsets = [0, 0], sizes = [8, 128], strides = [1, 1]} : vector<8x384xf32> to vector<8x128xf32>
    %159 = vector.extract_strided_slice %157 {offsets = [0, 128], sizes = [8, 128], strides = [1, 1]} : vector<8x384xf32> to vector<8x128xf32>
    %160 = vector.extract_strided_slice %157 {offsets = [0, 256], sizes = [8, 128], strides = [1, 1]} : vector<8x384xf32> to vector<8x128xf32>
    %161 = vector.extract_strided_slice %151 {offsets = [0, 384], sizes = [8, 128], strides = [1, 1]} : vector<8x512xf32> to vector<8x128xf32>
    %162 = math.tanh %161 : vector<8x128xf32>
    %163 = arith.mulf %159, %143 : vector<8x128xf32>
    %164 = arith.mulf %158, %162 : vector<8x128xf32>
    %165 = arith.addf %163, %164 : vector<8x128xf32>
    %166 = math.tanh %165 : vector<8x128xf32>
    %167 = arith.mulf %160, %166 : vector<8x128xf32>
    %c8_i32_48 = arith.constant 8 : i32
    %168 = arith.muli %arg0, %c8_i32_48 : i32
    %169 = arith.addi %168, %c5_i32 : i32
    %c10_i32_49 = arith.constant 10 : i32
    %170 = arith.cmpi slt, %169, %c10_i32_49 : i32
    %171 = arith.select %170, %165, %143 : vector<8x128xf32>
    %172 = arith.select %170, %167, %144 : vector<8x128xf32>
    %c6_i32 = arith.constant 6 : i32
    %173 = arith.index_cast %c6_i32 : i32 to index
    %c0_50 = arith.constant 0 : index
    %c0_51 = arith.constant 0 : index
    %174 = vector.load %arg1[%173, %c0_50, %c0_51] : memref<8x8x512xf32, #tpu.memory_space<vmem>>, vector<1x8x512xf32>
    %175 = vector.shape_cast %174 : vector<1x8x512xf32> to vector<8x512xf32>
    %176 = arith.truncf %172 : vector<8x128xf32> to vector<8x128xbf16>
    %c0_52 = arith.constant 0 : index
    %c0_53 = arith.constant 0 : index
    %177 = vector.load %arg8[%c0_52, %c0_53] : memref<128x512xbf16, #tpu.memory_space<vmem>>, vector<128x512xbf16>
    %cst_54 = arith.constant dense<0.000000e+00> : vector<8x512xf32>
    %178 = tpu.matmul %176, %177, %cst_54 {dimension_numbers = #tpu.dot_dimension_numbers<[1], [0], [0], [1], [0, 0, 1, 1], [], []>} : vector<8x128xbf16>, vector<128x512xbf16>, vector<8x512xf32> -> vector<8x512xf32>
    %179 = arith.addf %175, %178 : vector<8x512xf32>
    %180 = vector.extract_strided_slice %179 {offsets = [0, 0], sizes = [8, 384], strides = [1, 1]} : vector<8x512xf32> to vector<8x384xf32>
    %181 = arith.negf %180 : vector<8x384xf32>
    %182 = math.exp %181 : vector<8x384xf32>
    %cst_55 = arith.constant 1.000000e+00 : f32
    %183 = vector.broadcast %cst_55 : f32 to vector<8x384xf32>
    %184 = arith.addf %183, %182 : vector<8x384xf32>
    %185 = arith.divf %183, %184 : vector<8x384xf32>
    %186 = vector.extract_strided_slice %185 {offsets = [0, 0], sizes = [8, 128], strides = [1, 1]} : vector<8x384xf32> to vector<8x128xf32>
    %187 = vector.extract_strided_slice %185 {offsets = [0, 128], sizes = [8, 128], strides = [1, 1]} : vector<8x384xf32> to vector<8x128xf32>
    %188 = vector.extract_strided_slice %185 {offsets = [0, 256], sizes = [8, 128], strides = [1, 1]} : vector<8x384xf32> to vector<8x128xf32>
    %189 = vector.extract_strided_slice %179 {offsets = [0, 384], sizes = [8, 128], strides = [1, 1]} : vector<8x512xf32> to vector<8x128xf32>
    %190 = math.tanh %189 : vector<8x128xf32>
    %191 = arith.mulf %187, %171 : vector<8x128xf32>
    %192 = arith.mulf %186, %190 : vector<8x128xf32>
    %193 = arith.addf %191, %192 : vector<8x128xf32>
    %194 = math.tanh %193 : vector<8x128xf32>
    %195 = arith.mulf %188, %194 : vector<8x128xf32>
    %c8_i32_56 = arith.constant 8 : i32
    %196 = arith.muli %arg0, %c8_i32_56 : i32
    %197 = arith.addi %196, %c6_i32 : i32
    %c10_i32_57 = arith.constant 10 : i32
    %198 = arith.cmpi slt, %197, %c10_i32_57 : i32
    %199 = arith.select %198, %193, %171 : vector<8x128xf32>
    %200 = arith.select %198, %195, %172 : vector<8x128xf32>
    %c7_i32 = arith.constant 7 : i32
    %201 = arith.index_cast %c7_i32 : i32 to index
    %c0_58 = arith.constant 0 : index
    %c0_59 = arith.constant 0 : index
    %202 = vector.load %arg1[%201, %c0_58, %c0_59] : memref<8x8x512xf32, #tpu.memory_space<vmem>>, vector<1x8x512xf32>
    %203 = vector.shape_cast %202 : vector<1x8x512xf32> to vector<8x512xf32>
    %204 = arith.truncf %200 : vector<8x128xf32> to vector<8x128xbf16>
    %c0_60 = arith.constant 0 : index
    %c0_61 = arith.constant 0 : index
    %205 = vector.load %arg8[%c0_60, %c0_61] : memref<128x512xbf16, #tpu.memory_space<vmem>>, vector<128x512xbf16>
    %cst_62 = arith.constant dense<0.000000e+00> : vector<8x512xf32>
    %206 = tpu.matmul %204, %205, %cst_62 {dimension_numbers = #tpu.dot_dimension_numbers<[1], [0], [0], [1], [0, 0, 1, 1], [], []>} : vector<8x128xbf16>, vector<128x512xbf16>, vector<8x512xf32> -> vector<8x512xf32>
    %207 = arith.addf %203, %206 : vector<8x512xf32>
    %208 = vector.extract_strided_slice %207 {offsets = [0, 0], sizes = [8, 384], strides = [1, 1]} : vector<8x512xf32> to vector<8x384xf32>
    %209 = arith.negf %208 : vector<8x384xf32>
    %210 = math.exp %209 : vector<8x384xf32>
    %cst_63 = arith.constant 1.000000e+00 : f32
    %211 = vector.broadcast %cst_63 : f32 to vector<8x384xf32>
    %212 = arith.addf %211, %210 : vector<8x384xf32>
    %213 = arith.divf %211, %212 : vector<8x384xf32>
    %214 = vector.extract_strided_slice %213 {offsets = [0, 0], sizes = [8, 128], strides = [1, 1]} : vector<8x384xf32> to vector<8x128xf32>
    %215 = vector.extract_strided_slice %213 {offsets = [0, 128], sizes = [8, 128], strides = [1, 1]} : vector<8x384xf32> to vector<8x128xf32>
    %216 = vector.extract_strided_slice %213 {offsets = [0, 256], sizes = [8, 128], strides = [1, 1]} : vector<8x384xf32> to vector<8x128xf32>
    %217 = vector.extract_strided_slice %207 {offsets = [0, 384], sizes = [8, 128], strides = [1, 1]} : vector<8x512xf32> to vector<8x128xf32>
    %218 = math.tanh %217 : vector<8x128xf32>
    %219 = arith.mulf %215, %199 : vector<8x128xf32>
    %220 = arith.mulf %214, %218 : vector<8x128xf32>
    %221 = arith.addf %219, %220 : vector<8x128xf32>
    %222 = math.tanh %221 : vector<8x128xf32>
    %223 = arith.mulf %216, %222 : vector<8x128xf32>
    %c8_i32_64 = arith.constant 8 : i32
    %224 = arith.muli %arg0, %c8_i32_64 : i32
    %225 = arith.addi %224, %c7_i32 : i32
    %c10_i32_65 = arith.constant 10 : i32
    %226 = arith.cmpi slt, %225, %c10_i32_65 : i32
    %227 = arith.select %226, %221, %199 : vector<8x128xf32>
    %228 = arith.select %226, %223, %200 : vector<8x128xf32>
    %c8_i32_66 = arith.constant 8 : i32
    %c0_67 = arith.constant 0 : index
    %c0_68 = arith.constant 0 : index
    %229 = vector.load %arg6[%c0_67, %c0_68] : memref<8x128xf32, #tpu.memory_space<vmem>>, vector<8x128xf32>
    tpu.vector_store %arg6[%c0_67, %c0_68], %228 {strides = array<i32>} : memref<8x128xf32, #tpu.memory_space<vmem>>, vector<8x128xf32>,
    %c0_69 = arith.constant 0 : index
    %c0_70 = arith.constant 0 : index
    %230 = vector.load %arg7[%c0_69, %c0_70] : memref<8x128xf32, #tpu.memory_space<vmem>>, vector<8x128xf32>
    tpu.vector_store %arg7[%c0_69, %c0_70], %227 {strides = array<i32>} : memref<8x128xf32, #tpu.memory_space<vmem>>, vector<8x128xf32>,
    %c1_i32_71 = arith.constant 1 : i32
    %231 = arith.cmpi eq, %arg0, %c1_i32_71 : i32
    %232 = arith.extui %231 : i1 to i32
    %c0_i32_72 = arith.constant 0 : i32
    %233 = arith.cmpi ne, %232, %c0_i32_72 : i32
    scf.if %233 {
      %c0_73 = arith.constant 0 : index
      %c0_74 = arith.constant 0 : index
      %234 = vector.load %arg9[%c0_73, %c0_74] : memref<128x1xf32, #tpu.memory_space<vmem>>, vector<128x1xf32>
      %cst_75 = arith.constant dense<0.000000e+00> : vector<8x1xf32>
      %235 = tpu.matmul %228, %234, %cst_75 {dimension_numbers = #tpu.dot_dimension_numbers<[1], [0], [0], [1], [0, 0, 1, 1], [], []>} : vector<8x128xf32>, vector<128x1xf32>, vector<8x1xf32> -> vector<8x1xf32>
      %c0_76 = arith.constant 0 : index
      %c0_77 = arith.constant 0 : index
      %236 = vector.load %arg4[%c0_76, %c0_77] : memref<1x1xf32, #tpu.memory_space<vmem>>, vector<1x1xf32>
      %237 = vector.broadcast %236 : vector<1x1xf32> to vector<8x1xf32>
      %238 = arith.addf %235, %237 : vector<8x1xf32>
      %c0_78 = arith.constant 0 : index
      %c0_79 = arith.constant 0 : index
      %239 = vector.load %arg5[%c0_78, %c0_79] : memref<8x1xf32, #tpu.memory_space<vmem>>, vector<8x1xf32>
      tpu.vector_store %arg5[%c0_78, %c0_79], %238 {strides = array<i32>} : memref<8x1xf32, #tpu.memory_space<vmem>>, vector<8x1xf32>,
    } else {
    }
    return
  }
  func.func @transform_0(%arg0: i32) -> (i32, i32, i32) {
    %c0_i32 = arith.constant 0 : i32
    %c0_i32_0 = arith.constant 0 : i32
    %c0_i32_1 = arith.constant 0 : i32
    return %arg0, %c0_i32, %c0_i32_0 : i32, i32, i32
  }
  func.func @transform_3(%arg0: i32) -> (i32, i32) {
    %c0_i32 = arith.constant 0 : i32
    %c0_i32_0 = arith.constant 0 : i32
    %c0_i32_1 = arith.constant 0 : i32
    return %c0_i32, %c0_i32_0 : i32, i32
  }
  func.func @transform_4(%arg0: i32) -> (i32, i32) {
    %c0_i32 = arith.constant 0 : i32
    %c0_i32_0 = arith.constant 0 : i32
    %c0_i32_1 = arith.constant 0 : i32
    return %c0_i32, %c0_i32_0 : i32, i32
  }
}

</mosaic_0001>

<llo_original>
// kernel: lstm_forward.1
$region0: #{lstm_forward.1}
  #allocation0 [shape = 'u32[]', space=smem, size = 0x4, offset = 0x4, fixed_abs, tag = 'smem constant byte address 0x4 - core index']
  #allocation1 [shape = 'u32[144,128]{1,0:T(1,128)}', space=vmem, size = 0x12000, scoped, tag = 'internal scratch']
  #allocation2 [shape = 'f32[8,128]{1,0:T(8,128)}', space=vmem, size = 0x1000, scoped, tag = 'scratch operand']
  #allocation3 [shape = 'f32[8,128]{1,0:T(8,128)}', space=vmem, size = 0x1000, scoped, tag = 'scratch operand']
  #allocation4 [shape = 'bf16[128,512]{1,0:T(16,128)(2,1)}', space=vmem, size = 0x20000, scoped, tag = 'scratch operand']
  #allocation5 [shape = 'f32[128,1]{1,0:T(8,128)}', space=vmem, size = 0x10000, scoped, tag = 'scratch operand']
  #allocation6 [shape = 's32[2]{0}', space=sflag, size = 0x8, scoped, tag = 'scratch operand']
  #allocation7 [shape = 'f32[1,1]{1,0:T(1,128)S(1)}', space=vmem, size = 0x200, scoped, tag = 'scoped memory for lstm_forward.1']
  #allocation8 [shape = 's32[]', space=sflag, size = 0x4, offset = 0, fixed_abs, tag = 'sflag constant byte address 0x0 - dummy sync flag']
  #allocation9 [shape = 's32[]', space=sflag, size = 0x4, offset = 0, fixed_abs, tag = 'sflag constant byte address 0x0 - dummy sync flag']
  %s0 = inlined_call_operand.vmem [shape: f32[16,8,512], index: 0, kind: input, shape index: {}]
  %s1 = inlined_call_operand.vmem [shape: bf16[128,512], index: 1, kind: input, shape index: {}]
  %s2 = inlined_call_operand.vmem [shape: f32[128,1], index: 2, kind: input, shape index: {}]
  %s3 = inlined_call_operand.<no memory space> [shape: f32[1,1], index: 3, kind: input, shape index: {}]
  %s4 = inlined_call_operand.vmem [shape: f32[8,1], index: 4, kind: output, shape index: {}]
  %s5 = sld [smem:[#allocation0]]
  $region120: #{lstm_forward.1} parent=0
    _
  %s7 = ssub.s32 1, %s5
  %s8 = scalar_select 0, %s7, %s5
  %v9 = vstv %s3
  %10 = vst [vmem:[#allocation7] sm:$0x1] %v9
  loop: start=0, step=1, limit=4
  $region2: #{lstm_forward.1} parent=0 // loop_pre_header
    _
  $region3: #{lstm_forward.1} parent=0 // loop_header
    %s12 = sphi 0, %s16
    %p13 = scmp.ge.s32.totalorder %s12, 4
    %s22 = sphi 0, %s24
    %s25 = sphi 0, %s22
    %s26 = sphi 0, %s25
    %s42 = sphi 0, %s26
    %s46 = sphi 0, %s46
    %s48 = sphi 0, %s46
    %s49 = sphi 0, %s48
    %s63 = sphi 0, %s49
    %s67 = sphi 0, %s67
    %s69 = sphi 0, %s67
    %s70 = sphi 0, %s69
    %s84 = sphi 0, %s70
  $region4: #{lstm_forward.1} parent=0 // loop_header_branch
    %15 = sbr.rel (%p13) target = $region8
  $region5: #{lstm_forward.1} parent=0 // loop_body
    %s17 = ssub.s32 %s12, 1
    %s18 = ssub.s32 %s12, 2
    %s19 = sadd.s32 %s12, 1
    %s20 = ssub.s32 %s12, %s19
    %p21 = scmp.eq.s32.totalorder %s20, 0
    %s23 = sadd.s32 %s22, 1
    %s24 = scalar_select %p21, %s22, %s23
    %p27 = pneg %p21
    %p28 = scmp.eq.s32.totalorder %s12, 1
    %p29 = por %p27, %p28
    %p30 = scmp.ne.s32.totalorder %s22, %s25
    %p31 = scmp.eq.s32.totalorder %s12, 0
    %p32 = por %p30, %p31
    %p33 = scmp.ne.s32.totalorder %s22, %s25
    %p34 = scmp.eq.s32.totalorder %s17, 1
    %p35 = por %p33, %p34
    %p36 = scmp.ne.s32.totalorder %s25, %s26
    %p37 = scmp.eq.s32.totalorder %s17, 0
    %p38 = por %p36, %p37
    %p39 = scmp.ne.s32.totalorder %s25, %s26
    %p40 = scmp.eq.s32.totalorder %s18, 1
    %p41 = por %p39, %p40
    %p43 = scmp.ne.s32.totalorder %s26, %s42
    %p44 = scmp.eq.s32.totalorder %s18, 0
    %p45 = por %p43, %p44
    %s47 = sadd.s32 %s46, 1
    %p50 = scmp.eq.s32.totalorder %s12, 1
    %p51 = scmp.ne.s32.totalorder %s46, %s48
    %p52 = scmp.eq.s32.totalorder %s12, 0
    %p53 = por %p51, %p52
    %p54 = scmp.ne.s32.totalorder %s46, %s48
    %p55 = scmp.eq.s32.totalorder %s17, 1
    %p56 = por %p54, %p55
    %p57 = scmp.ne.s32.totalorder %s48, %s49
    %p58 = scmp.eq.s32.totalorder %s17, 0
    %p59 = por %p57, %p58
    %p60 = scmp.ne.s32.totalorder %s48, %s49
    %p61 = scmp.eq.s32.totalorder %s18, 1
    %p62 = por %p60, %p61
    %p64 = scmp.ne.s32.totalorder %s49, %s63
    %p65 = scmp.eq.s32.totalorder %s18, 0
    %p66 = por %p64, %p65
    %s68 = sadd.s32 %s67, 1
    %p71 = scmp.eq.s32.totalorder %s12, 1
    %p72 = scmp.ne.s32.totalorder %s67, %s69
    %p73 = scmp.eq.s32.totalorder %s12, 0
    %p74 = por %p72, %p73
    %p75 = scmp.ne.s32.totalorder %s67, %s69
    %p76 = scmp.eq.s32.totalorder %s17, 1
    %p77 = por %p75, %p76
    %p78 = scmp.ne.s32.totalorder %s69, %s70
    %p79 = scmp.eq.s32.totalorder %s17, 0
    %p80 = por %p78, %p79
    %p81 = scmp.ne.s32.totalorder %s69, %s70
    %p82 = scmp.eq.s32.totalorder %s18, 1
    %p83 = por %p81, %p82
    %p85 = scmp.ne.s32.totalorder %s70, %s84
    %p86 = scmp.eq.s32.totalorder %s18, 0
    %p87 = por %p85, %p86
    %p88 = scmp.le.s32.totalorder 1, %s12
    %p89 = scmp.lt.s32.totalorder %s12, 3
    %p90 = pnand %p88, %p89
    %p91 = pneg %p90
    // Predicated region
    $region9: #{lstm_forward.1} parent=5 // pred_check
      _
    $region10: #{lstm_forward.1} parent=5 // pred_check_branch
      %93 = sbr.rel (%p90) target = $region12
    $region11: #{lstm_forward.1} parent=5 // pred_region
      %s94 = ssub.s32 %s12, 1
      // Predicated region
      $region13: #{lstm_forward.1} parent=11 // pred_check
        %p95 = pneg %p59
      $region14: #{lstm_forward.1} parent=11 // pred_check_branch
        %97 = sbr.rel (%p95) target = $region16
      $region15: #{lstm_forward.1} parent=11 // pred_region
        _
      $region16: #{lstm_forward.1} parent=11 // pred_fallthru
        _
    $region12: #{lstm_forward.1} parent=5 // pred_fallthru
      _
    %p98 = scmp.lt.s32.totalorder %s12, 2
    // Predicated region
    $region17: #{lstm_forward.1} parent=5 // pred_check
      %p99 = pneg %p98
    $region18: #{lstm_forward.1} parent=5 // pred_check_branch
      %101 = sbr.rel (%p99) target = $region20
    $region19: #{lstm_forward.1} parent=5 // pred_region
      // Predicated region
      $region21: #{lstm_forward.1} parent=19 // pred_check
        %p102 = pneg %p32
      $region22: #{lstm_forward.1} parent=19 // pred_check_branch
        %104 = sbr.rel (%p102) target = $region24
      $region23: #{lstm_forward.1} parent=19 // pred_region
        %s105 = smul.u32 8, %s12
        %p106 = scmp.lt.s32.totalorder %s105, 15
        %s107 = scalar_select %p106, %s105, 15
        %s108 = smul.addr %s107, 4
        %s109 = smul.addr %s108, 8
        %s110 = scalar_lea.vmem %s0, %s109
        %s111 = smul.u32 8, %s12
      $region24: #{lstm_forward.1} parent=19 // pred_fallthru
        _
    $region20: #{lstm_forward.1} parent=5 // pred_fallthru
      _
    %p112 = scmp.le.s32.totalorder 1, %s12
    %p113 = scmp.lt.s32.totalorder %s12, 3
    %p114 = pnand %p112, %p113
    %p115 = pneg %p114
    // Predicated region
    $region25: #{lstm_forward.1} parent=5 // pred_check
      _
    $region26: #{lstm_forward.1} parent=5 // pred_check_branch
      %117 = sbr.rel (%p114) target = $region28
    $region27: #{lstm_forward.1} parent=5 // pred_region
      %s118 = ssub.s32 %s12, 1
      %s119 = smul.u32 8, %s17
      %p120 = scmp.lt.s32.totalorder %s119, 15
      %s121 = scalar_select %p120, %s119, 15
      %s122 = smul.addr %s121, 4
      %s123 = smul.addr %s122, 8
      %s124 = scalar_lea.vmem %s0, %s123
      %p125 = pneg %p38
      %p126 = pneg %p35
      %p127 = pneg %p59
      %p128 = pneg %p56
      %p129 = pneg %p80
      %p130 = pneg %p77
      %s131 = smul.u32 8, %s17
      %p132 = scmp.lt.s32.totalorder %s131, 15
      %s133 = scalar_select %p132, %s131, 15
      %s134 = smul.addr %s133, 4
      %s135 = smul.addr %s134, 8
      %s136 = scalar_lea.vmem %s0, %s135
      %s137 = smul.u32 8, %s17
      %p139 = scmp.eq.s32.totalorder %s17, 0
      // Predicated region
      $region29: #{lstm_forward.1} parent=27 // pred_check
        %p140 = pneg %p139
      $region30: #{lstm_forward.1} parent=27 // pred_check_branch
        %142 = sbr.rel (%p140) target = $region32
      $region31: #{lstm_forward.1} parent=27 // pred_region
        %143 = vst [vmem:[#allocation2] sm:$0xff] 0.0
        %144 = vst [vmem:[#allocation3] sm:$0xff] 0.0
        %p146 = scmp.lt.u32.totalorder 4, 8
        %p147 = pneg %p146
        // Predicated region
        $region33: #{lstm_forward.1} parent=31 // pred_check
          _
        $region34: #{lstm_forward.1} parent=31 // pred_check_branch
          %149 = sbr.rel (%p146) target = $region36
        $region35: #{lstm_forward.1} parent=31 // pred_region
          %s290 = sand.u32 4, 7
          %p291 = scmp.eq.s32.totalorder %s290, 0
          %p292 = pneg %p291
          // Predicated region
          $region48: #{lstm_forward.1} parent=35 // pred_check
            _
          $region49: #{lstm_forward.1} parent=35 // pred_check_branch
            %294 = sbr.rel (%p291) target = $region51
          $region50: #{lstm_forward.1} parent=35 // pred_region
            %s295 = sand.u32 4, 7
            %s296 = ssub.s32 4, %s295
            %s297 = scalar_lea.vmem %s1, %s296
            %s298 = ssub.s32 4, %s295
            %s299 = scalar_lea.vmem [#allocation4], %s298
            loop: start=0, step=1, limit=1
            $region52: #{lstm_forward.1} parent=50 // loop_pre_header
              _
            $region53: #{lstm_forward.1} parent=50 // loop_header
              %s301 = sphi 0, %s305
              %p302 = scmp.ge.s32.totalorder %s301, 1
              %s306 = sphi %s1, %s1
              %s307 = sphi [#allocation4], [#allocation4]
            $region54: #{lstm_forward.1} parent=50 // loop_header_branch
              %304 = sbr.rel (%p302) target = $region58
            $region55: #{lstm_forward.1} parent=50 // loop_body
              _
            $region56: #{lstm_forward.1} parent=50 // loop_footer
              %s305 = sadd.s32 1, %s301
            $region57: #{lstm_forward.1} parent=50 // loop_footer_branch
              %300 = sbr.rel target = $region53
            $region58: #{lstm_forward.1} parent=50 // loop_exit
              _
            %s308 = sshllo.u32 0, %s295
            loop: start=0, step=1, limit=1
            $region59: #{lstm_forward.1} parent=50 // loop_pre_header
              _
            $region60: #{lstm_forward.1} parent=50 // loop_header
              %s310 = sphi 0, %s314
              %p311 = scmp.ge.s32.totalorder %s310, 1
              %s315 = sphi %s297, %s297
              %s316 = sphi %s299, %s299
            $region61: #{lstm_forward.1} parent=50 // loop_header_branch
              %313 = sbr.rel (%p311) target = $region65
            $region62: #{lstm_forward.1} parent=50 // loop_body
              %v317 = vld [vmem:[%s315] sm:%s308]
              %318 = vst [vmem:[%s316] sm:%s308] %v317
              %v319 = vld [vmem:[%s315 + $0x10] sm:%s308]
              %320 = vst [vmem:[%s316 + $0x4] sm:%s308] %v319
              %v321 = vld [vmem:[%s315 + $0x4] sm:%s308]
              %322 = vst [vmem:[%s316 + $0x8] sm:%s308] %v321
              %v323 = vld [vmem:[%s315 + $0x14] sm:%s308]
              %324 = vst [vmem:[%s316 + $0xc] sm:%s308] %v323
              %v325 = vld [vmem:[%s315 + $0x8] sm:%s308]
              %326 = vst [vmem:[%s316 + $0x10] sm:%s308] %v325
              %v327 = vld [vmem:[%s315 + $0x18] sm:%s308]
              %328 = vst [vmem:[%s316 + $0x14] sm:%s308] %v327
              %v329 = vld [vmem:[%s315 + $0xc] sm:%s308]
              %330 = vst [vmem:[%s316 + $0x18] sm:%s308] %v329
              %v331 = vld [vmem:[%s315 + $0x1c] sm:%s308]
              %332 = vst [vmem:[%s316 + $0x1c] sm:%s308] %v331
              %v333 = vld [vmem:[%s315 + $0x20] sm:%s308]
              %334 = vst [vmem:[%s316 + $0x20] sm:%s308] %v333
              %v335 = vld [vmem:[%s315 + $0x30] sm:%s308]
              %336 = vst [vmem:[%s316 + $0x24] sm:%s308] %v335
              %v337 = vld [vmem:[%s315 + $0x24] sm:%s308]
              %338 = vst [vmem:[%s316 + $0x28] sm:%s308] %v337
              %v339 = vld [vmem:[%s315 + $0x34] sm:%s308]
              %340 = vst [vmem:[%s316 + $0x2c] sm:%s308] %v339
              %v341 = vld [vmem:[%s315 + $0x28] sm:%s308]
              %342 = vst [vmem:[%s316 + $0x30] sm:%s308] %v341
              %v343 = vld [vmem:[%s315 + $0x38] sm:%s308]
              %344 = vst [vmem:[%s316 + $0x34] sm:%s308] %v343
              %v345 = vld [vmem:[%s315 + $0x2c] sm:%s308]
              %346 = vst [vmem:[%s316 + $0x38] sm:%s308] %v345
              %v347 = vld [vmem:[%s315 + $0x3c] sm:%s308]
              %348 = vst [vmem:[%s316 + $0x3c] sm:%s308] %v347
              %v349 = vld [vmem:[%s315 + $0x40] sm:%s308]
              %350 = vst [vmem:[%s316 + $0x40] sm:%s308] %v349
              %v351 = vld [vmem:[%s315 + $0x50] sm:%s308]
              %352 = vst [vmem:[%s316 + $0x44] sm:%s308] %v351
              %v353 = vld [vmem:[%s315 + $0x44] sm:%s308]
              %354 = vst [vmem:[%s316 + $0x48] sm:%s308] %v353
              %v355 = vld [vmem:[%s315 + $0x54] sm:%s308]
              %356 = vst [vmem:[%s316 + $0x4c] sm:%s308] %v355
              %v357 = vld [vmem:[%s315 + $0x48] sm:%s308]
              %358 = vst [vmem:[%s316 + $0x50] sm:%s308] %v357
              %v359 = vld [vmem:[%s315 + $0x58] sm:%s308]
              %360 = vst [vmem:[%s316 + $0x54] sm:%s308] %v359
              %v361 = vld [vmem:[%s315 + $0x4c] sm:%s308]
              %362 = vst [vmem:[%s316 + $0x58] sm:%s308] %v361
              %v363 = vld [vmem:[%s315 + $0x5c] sm:%s308]
              %364 = vst [vmem:[%s316 + $0x5c] sm:%s308] %v363
              %v365 = vld [vmem:[%s315 + $0x60] sm:%s308]
              %366 = vst [vmem:[%s316 + $0x60] sm:%s308] %v365
              %v367 = vld [vmem:[%s315 + $0x70] sm:%s308]
              %368 = vst [vmem:[%s316 + $0x64] sm:%s308] %v367
              %v369 = vld [vmem:[%s315 + $0x64] sm:%s308]
              %370 = vst [vmem:[%s316 + $0x68] sm:%s308] %v369
              %v371 = vld [vmem:[%s315 + $0x74] sm:%s308]
              %372 = vst [vmem:[%s316 + $0x6c] sm:%s308] %v371
              %v373 = vld [vmem:[%s315 + $0x68] sm:%s308]
              %374 = vst [vmem:[%s316 + $0x70] sm:%s308] %v373
              %v375 = vld [vmem:[%s315 + $0x78] sm:%s308]
              %376 = vst [vmem:[%s316 + $0x74] sm:%s308] %v375
              %v377 = vld [vmem:[%s315 + $0x6c] sm:%s308]
              %378 = vst [vmem:[%s316 + $0x78] sm:%s308] %v377
              %v379 = vld [vmem:[%s315 + $0x7c] sm:%s308]
              %380 = vst [vmem:[%s316 + $0x7c] sm:%s308] %v379
              %v381 = vld [vmem:[%s315 + $0x80] sm:%s308]
              %382 = vst [vmem:[%s316 + $0x80] sm:%s308] %v381
              %v383 = vld [vmem:[%s315 + $0x90] sm:%s308]
              %384 = vst [vmem:[%s316 + $0x84] sm:%s308] %v383
              %v385 = vld [vmem:[%s315 + $0x84] sm:%s308]
              %386 = vst [vmem:[%s316 + $0x88] sm:%s308] %v385
              %v387 = vld [vmem:[%s315 + $0x94] sm:%s308]
              %388 = vst [vmem:[%s316 + $0x8c] sm:%s308] %v387
              %v389 = vld [vmem:[%s315 + $0x88] sm:%s308]
              %390 = vst [vmem:[%s316 + $0x90] sm:%s308] %v389
              %v391 = vld [vmem:[%s315 + $0x98] sm:%s308]
              %392 = vst [vmem:[%s316 + $0x94] sm:%s308] %v391
              %v393 = vld [vmem:[%s315 + $0x8c] sm:%s308]
              %394 = vst [vmem:[%s316 + $0x98] sm:%s308] %v393
              %v395 = vld [vmem:[%s315 + $0x9c] sm:%s308]
              %396 = vst [vmem:[%s316 + $0x9c] sm:%s308] %v395
              %v397 = vld [vmem:[%s315 + $0xa0] sm:%s308]
              %398 = vst [vmem:[%s316 + $0xa0] sm:%s308] %v397
              %v399 = vld [vmem:[%s315 + $0xb0] sm:%s308]
              %400 = vst [vmem:[%s316 + $0xa4] sm:%s308] %v399
              %v401 = vld [vmem:[%s315 + $0xa4] sm:%s308]
              %402 = vst [vmem:[%s316 + $0xa8] sm:%s308] %v401
              %v403 = vld [vmem:[%s315 + $0xb4] sm:%s308]
              %404 = vst [vmem:[%s316 + $0xac] sm:%s308] %v403
              %v405 = vld [vmem:[%s315 + $0xa8] sm:%s308]
              %406 = vst [vmem:[%s316 + $0xb0] sm:%s308] %v405
              %v407 = vld [vmem:[%s315 + $0xb8] sm:%s308]
              %408 = vst [vmem:[%s316 + $0xb4] sm:%s308] %v407
              %v409 = vld [vmem:[%s315 + $0xac] sm:%s308]
              %410 = vst [vmem:[%s316 + $0xb8] sm:%s308] %v409
              %v411 = vld [vmem:[%s315 + $0xbc] sm:%s308]
              %412 = vst [vmem:[%s316 + $0xbc] sm:%s308] %v411
              %v413 = vld [vmem:[%s315 + $0xc0] sm:%s308]
              %414 = vst [vmem:[%s316 + $0xc0] sm:%s308] %v413
              %v415 = vld [vmem:[%s315 + $0xd0] sm:%s308]
              %416 = vst [vmem:[%s316 + $0xc4] sm:%s308] %v415
              %v417 = vld [vmem:[%s315 + $0xc4] sm:%s308]
              %418 = vst [vmem:[%s316 + $0xc8] sm:%s308] %v417
              %v419 = vld [vmem:[%s315 + $0xd4] sm:%s308]
              %420 = vst [vmem:[%s316 + $0xcc] sm:%s308] %v419
              %v421 = vld [vmem:[%s315 + $0xc8] sm:%s308]
              %422 = vst [vmem:[%s316 + $0xd0] sm:%s308] %v421
              %v423 = vld [vmem:[%s315 + $0xd8] sm:%s308]
              %424 = vst [vmem:[%s316 + $0xd4] sm:%s308] %v423
              %v425 = vld [vmem:[%s315 + $0xcc] sm:%s308]
              %426 = vst [vmem:[%s316 + $0xd8] sm:%s308] %v425
              %v427 = vld [vmem:[%s315 + $0xdc] sm:%s308]
              %428 = vst [vmem:[%s316 + $0xdc] sm:%s308] %v427
              %v429 = vld [vmem:[%s315 + $0xe0] sm:%s308]
              %430 = vst [vmem:[%s316 + $0xe0] sm:%s308] %v429
              %v431 = vld [vmem:[%s315 + $0xf0] sm:%s308]
              %432 = vst [vmem:[%s316 + $0xe4] sm:%s308] %v431
              %v433 = vld [vmem:[%s315 + $0xe4] sm:%s308]
              %434 = vst [vmem:[%s316 + $0xe8] sm:%s308] %v433
              %v435 = vld [vmem:[%s315 + $0xf4] sm:%s308]
              %436 = vst [vmem:[%s316 + $0xec] sm:%s308] %v435
              %v437 = vld [vmem:[%s315 + $0xe8] sm:%s308]
              %438 = vst [vmem:[%s316 + $0xf0] sm:%s308] %v437
              %v439 = vld [vmem:[%s315 + $0xf8] sm:%s308]
              %440 = vst [vmem:[%s316 + $0xf4] sm:%s308] %v439
              %v441 = vld [vmem:[%s315 + $0xec] sm:%s308]
              %442 = vst [vmem:[%s316 + $0xf8] sm:%s308] %v441
              %v443 = vld [vmem:[%s315 + $0xfc] sm:%s308]
              %444 = vst [vmem:[%s316 + $0xfc] sm:%s308] %v443
            $region63: #{lstm_forward.1} parent=50 // loop_footer
              %s314 = sadd.s32 1, %s310
            $region64: #{lstm_forward.1} parent=50 // loop_footer_branch
              %309 = sbr.rel target = $region60
            $region65: #{lstm_forward.1} parent=50 // loop_exit
              _
          $region51: #{lstm_forward.1} parent=35 // pred_fallthru
            _
        $region36: #{lstm_forward.1} parent=31 // pred_fallthru
          _
        // Predicated region
        $region37: #{lstm_forward.1} parent=31 // pred_check
          %p150 = pneg %p146
        $region38: #{lstm_forward.1} parent=31 // pred_check_branch
          %152 = sbr.rel (%p150) target = $region40
        $region39: #{lstm_forward.1} parent=31 // pred_region
          %s153 = sshllo.u32 0, 4
          loop: start=0, step=1, limit=1
          $region41: #{lstm_forward.1} parent=39 // loop_pre_header
            _
          $region42: #{lstm_forward.1} parent=39 // loop_header
            %s155 = sphi 0, %s159
            %p156 = scmp.ge.s32.totalorder %s155, 1
            %s160 = sphi %s1, %s1
            %s161 = sphi [#allocation4], [#allocation4]
          $region43: #{lstm_forward.1} parent=39 // loop_header_branch
            %158 = sbr.rel (%p156) target = $region47
          $region44: #{lstm_forward.1} parent=39 // loop_body
            %v162 = vld [vmem:[%s160] sm:%s153]
            %163 = vst [vmem:[%s161] sm:%s153] %v162
            %v164 = vld [vmem:[%s160 + $0x10] sm:%s153]
            %165 = vst [vmem:[%s161 + $0x4] sm:%s153] %v164
            %v166 = vld [vmem:[%s160 + $0x4] sm:%s153]
            %167 = vst [vmem:[%s161 + $0x8] sm:%s153] %v166
            %v168 = vld [vmem:[%s160 + $0x14] sm:%s153]
            %169 = vst [vmem:[%s161 + $0xc] sm:%s153] %v168
            %v170 = vld [vmem:[%s160 + $0x8] sm:%s153]
            %171 = vst [vmem:[%s161 + $0x10] sm:%s153] %v170
            %v172 = vld [vmem:[%s160 + $0x18] sm:%s153]
            %173 = vst [vmem:[%s161 + $0x14] sm:%s153] %v172
            %v174 = vld [vmem:[%s160 + $0xc] sm:%s153]
            %175 = vst [vmem:[%s161 + $0x18] sm:%s153] %v174
            %v176 = vld [vmem:[%s160 + $0x1c] sm:%s153]
            %177 = vst [vmem:[%s161 + $0x1c] sm:%s153] %v176
            %v178 = vld [vmem:[%s160 + $0x20] sm:%s153]
            %179 = vst [vmem:[%s161 + $0x20] sm:%s153] %v178
            %v180 = vld [vmem:[%s160 + $0x30] sm:%s153]
            %181 = vst [vmem:[%s161 + $0x24] sm:%s153] %v180
            %v182 = vld [vmem:[%s160 + $0x24] sm:%s153]
            %183 = vst [vmem:[%s161 + $0x28] sm:%s153] %v182
            %v184 = vld [vmem:[%s160 + $0x34] sm:%s153]
            %185 = vst [vmem:[%s161 + $0x2c] sm:%s153] %v184
            %v186 = vld [vmem:[%s160 + $0x28] sm:%s153]
            %187 = vst [vmem:[%s161 + $0x30] sm:%s153] %v186
            %v188 = vld [vmem:[%s160 + $0x38] sm:%s153]
            %189 = vst [vmem:[%s161 + $0x34] sm:%s153] %v188
            %v190 = vld [vmem:[%s160 + $0x2c] sm:%s153]
            %191 = vst [vmem:[%s161 + $0x38] sm:%s153] %v190
            %v192 = vld [vmem:[%s160 + $0x3c] sm:%s153]
            %193 = vst [vmem:[%s161 + $0x3c] sm:%s153] %v192
            %v194 = vld [vmem:[%s160 + $0x40] sm:%s153]
            %195 = vst [vmem:[%s161 + $0x40] sm:%s153] %v194
            %v196 = vld [vmem:[%s160 + $0x50] sm:%s153]
            %197 = vst [vmem:[%s161 + $0x44] sm:%s153] %v196
            %v198 = vld [vmem:[%s160 + $0x44] sm:%s153]
            %199 = vst [vmem:[%s161 + $0x48] sm:%s153] %v198
            %v200 = vld [vmem:[%s160 + $0x54] sm:%s153]
            %201 = vst [vmem:[%s161 + $0x4c] sm:%s153] %v200
            %v202 = vld [vmem:[%s160 + $0x48] sm:%s153]
            %203 = vst [vmem:[%s161 + $0x50] sm:%s153] %v202
            %v204 = vld [vmem:[%s160 + $0x58] sm:%s153]
            %205 = vst [vmem:[%s161 + $0x54] sm:%s153] %v204
            %v206 = vld [vmem:[%s160 + $0x4c] sm:%s153]
            %207 = vst [vmem:[%s161 + $0x58] sm:%s153] %v206
            %v208 = vld [vmem:[%s160 + $0x5c] sm:%s153]
            %209 = vst [vmem:[%s161 + $0x5c] sm:%s153] %v208
            %v210 = vld [vmem:[%s160 + $0x60] sm:%s153]
            %211 = vst [vmem:[%s161 + $0x60] sm:%s153] %v210
            %v212 = vld [vmem:[%s160 + $0x70] sm:%s153]
            %213 = vst [vmem:[%s161 + $0x64] sm:%s153] %v212
            %v214 = vld [vmem:[%s160 + $0x64] sm:%s153]
            %215 = vst [vmem:[%s161 + $0x68] sm:%s153] %v214
            %v216 = vld [vmem:[%s160 + $0x74] sm:%s153]
            %217 = vst [vmem:[%s161 + $0x6c] sm:%s153] %v216
            %v218 = vld [vmem:[%s160 + $0x68] sm:%s153]
            %219 = vst [vmem:[%s161 + $0x70] sm:%s153] %v218
            %v220 = vld [vmem:[%s160 + $0x78] sm:%s153]
            %221 = vst [vmem:[%s161 + $0x74] sm:%s153] %v220
            %v222 = vld [vmem:[%s160 + $0x6c] sm:%s153]
            %223 = vst [vmem:[%s161 + $0x78] sm:%s153] %v222
            %v224 = vld [vmem:[%s160 + $0x7c] sm:%s153]
            %225 = vst [vmem:[%s161 + $0x7c] sm:%s153] %v224
            %v226 = vld [vmem:[%s160 + $0x80] sm:%s153]
            %227 = vst [vmem:[%s161 + $0x80] sm:%s153] %v226
            %v228 = vld [vmem:[%s160 + $0x90] sm:%s153]
            %229 = vst [vmem:[%s161 + $0x84] sm:%s153] %v228
            %v230 = vld [vmem:[%s160 + $0x84] sm:%s153]
            %231 = vst [vmem:[%s161 + $0x88] sm:%s153] %v230
            %v232 = vld [vmem:[%s160 + $0x94] sm:%s153]
            %233 = vst [vmem:[%s161 + $0x8c] sm:%s153] %v232
            %v234 = vld [vmem:[%s160 + $0x88] sm:%s153]
            %235 = vst [vmem:[%s161 + $0x90] sm:%s153] %v234
            %v236 = vld [vmem:[%s160 + $0x98] sm:%s153]
            %237 = vst [vmem:[%s161 + $0x94] sm:%s153] %v236
            %v238 = vld [vmem:[%s160 + $0x8c] sm:%s153]
            %239 = vst [vmem:[%s161 + $0x98] sm:%s153] %v238
            %v240 = vld [vmem:[%s160 + $0x9c] sm:%s153]
            %241 = vst [vmem:[%s161 + $0x9c] sm:%s153] %v240
            %v242 = vld [vmem:[%s160 + $0xa0] sm:%s153]
            %243 = vst [vmem:[%s161 + $0xa0] sm:%s153] %v242
            %v244 = vld [vmem:[%s160 + $0xb0] sm:%s153]
            %245 = vst [vmem:[%s161 + $0xa4] sm:%s153] %v244
            %v246 = vld [vmem:[%s160 + $0xa4] sm:%s153]
            %247 = vst [vmem:[%s161 + $0xa8] sm:%s153] %v246
            %v248 = vld [vmem:[%s160 + $0xb4] sm:%s153]
            %249 = vst [vmem:[%s161 + $0xac] sm:%s153] %v248
            %v250 = vld [vmem:[%s160 + $0xa8] sm:%s153]
            %251 = vst [vmem:[%s161 + $0xb0] sm:%s153] %v250
            %v252 = vld [vmem:[%s160 + $0xb8] sm:%s153]
            %253 = vst [vmem:[%s161 + $0xb4] sm:%s153] %v252
            %v254 = vld [vmem:[%s160 + $0xac] sm:%s153]
            %255 = vst [vmem:[%s161 + $0xb8] sm:%s153] %v254
            %v256 = vld [vmem:[%s160 + $0xbc] sm:%s153]
            %257 = vst [vmem:[%s161 + $0xbc] sm:%s153] %v256
            %v258 = vld [vmem:[%s160 + $0xc0] sm:%s153]
            %259 = vst [vmem:[%s161 + $0xc0] sm:%s153] %v258
            %v260 = vld [vmem:[%s160 + $0xd0] sm:%s153]
            %261 = vst [vmem:[%s161 + $0xc4] sm:%s153] %v260
            %v262 = vld [vmem:[%s160 + $0xc4] sm:%s153]
            %263 = vst [vmem:[%s161 + $0xc8] sm:%s153] %v262
            %v264 = vld [vmem:[%s160 + $0xd4] sm:%s153]
            %265 = vst [vmem:[%s161 + $0xcc] sm:%s153] %v264
            %v266 = vld [vmem:[%s160 + $0xc8] sm:%s153]
            %267 = vst [vmem:[%s161 + $0xd0] sm:%s153] %v266
            %v268 = vld [vmem:[%s160 + $0xd8] sm:%s153]
            %269 = vst [vmem:[%s161 + $0xd4] sm:%s153] %v268
            %v270 = vld [vmem:[%s160 + $0xcc] sm:%s153]
            %271 = vst [vmem:[%s161 + $0xd8] sm:%s153] %v270
            %v272 = vld [vmem:[%s160 + $0xdc] sm:%s153]
            %273 = vst [vmem:[%s161 + $0xdc] sm:%s153] %v272
            %v274 = vld [vmem:[%s160 + $0xe0] sm:%s153]
            %275 = vst [vmem:[%s161 + $0xe0] sm:%s153] %v274
            %v276 = vld [vmem:[%s160 + $0xf0] sm:%s153]
            %277 = vst [vmem:[%s161 + $0xe4] sm:%s153] %v276
            %v278 = vld [vmem:[%s160 + $0xe4] sm:%s153]
            %279 = vst [vmem:[%s161 + $0xe8] sm:%s153] %v278
            %v280 = vld [vmem:[%s160 + $0xf4] sm:%s153]
            %281 = vst [vmem:[%s161 + $0xec] sm:%s153] %v280
            %v282 = vld [vmem:[%s160 + $0xe8] sm:%s153]
            %283 = vst [vmem:[%s161 + $0xf0] sm:%s153] %v282
            %v284 = vld [vmem:[%s160 + $0xf8] sm:%s153]
            %285 = vst [vmem:[%s161 + $0xf4] sm:%s153] %v284
            %v286 = vld [vmem:[%s160 + $0xec] sm:%s153]
            %287 = vst [vmem:[%s161 + $0xf8] sm:%s153] %v286
            %v288 = vld [vmem:[%s160 + $0xfc] sm:%s153]
            %289 = vst [vmem:[%s161 + $0xfc] sm:%s153] %v288
          $region45: #{lstm_forward.1} parent=39 // loop_footer
            %s159 = sadd.s32 1, %s155
          $region46: #{lstm_forward.1} parent=39 // loop_footer_branch
            %154 = sbr.rel target = $region42
          $region47: #{lstm_forward.1} parent=39 // loop_exit
            _
        $region40: #{lstm_forward.1} parent=31 // pred_fallthru
          _
        // Predicated region
        $region66: #{lstm_forward.1} parent=31 // pred_check
          _
        $region67: #{lstm_forward.1} parent=31 // pred_check_branch
          %447 = sbr.rel (0) target = $region69
        $region68: #{lstm_forward.1} parent=31 // pred_region
          %448 = vsyncadd [#allocation6], 4096
        $region69: #{lstm_forward.1} parent=31 // pred_fallthru
          _
        %s449 = scalar_lea.sflag [#allocation6], 1
        %p451 = scmp.lt.u32.totalorder 128, 8
        %p452 = pneg %p451
        // Predicated region
        $region70: #{lstm_forward.1} parent=31 // pred_check
          _
        $region71: #{lstm_forward.1} parent=31 // pred_check_branch
          %454 = sbr.rel (%p451) target = $region73
        $region72: #{lstm_forward.1} parent=31 // pred_region
          %s469 = sand.u32 128, 7
          %p470 = scmp.eq.s32.totalorder %s469, 0
          // Predicated region
          $region85: #{lstm_forward.1} parent=72 // pred_check
            %p471 = pneg %p470
          $region86: #{lstm_forward.1} parent=72 // pred_check_branch
            %473 = sbr.rel (%p471) target = $region88
          $region87: #{lstm_forward.1} parent=72 // pred_region
            loop: start=0, step=1, limit=1
            $region89: #{lstm_forward.1} parent=87 // loop_pre_header
              _
            $region90: #{lstm_forward.1} parent=87 // loop_header
              %s475 = sphi 0, %s479
              %p476 = scmp.ge.s32.totalorder %s475, 1
              %s480 = sphi %s2, %s2
              %s481 = sphi [#allocation5], [#allocation5]
            $region91: #{lstm_forward.1} parent=87 // loop_header_branch
              %478 = sbr.rel (%p476) target = $region95
            $region92: #{lstm_forward.1} parent=87 // loop_body
              %v482 = vld [vmem:[%s480] sm:$0xff]
              %483 = vst [vmem:[%s481] sm:$0xff] %v482
              %v484 = vld [vmem:[%s480 + $0x8] sm:$0xff]
              %485 = vst [vmem:[%s481 + $0x8] sm:$0xff] %v484
              %v486 = vld [vmem:[%s480 + $0x10] sm:$0xff]
              %487 = vst [vmem:[%s481 + $0x10] sm:$0xff] %v486
              %v488 = vld [vmem:[%s480 + $0x18] sm:$0xff]
              %489 = vst [vmem:[%s481 + $0x18] sm:$0xff] %v488
              %v490 = vld [vmem:[%s480 + $0x20] sm:$0xff]
              %491 = vst [vmem:[%s481 + $0x20] sm:$0xff] %v490
              %v492 = vld [vmem:[%s480 + $0x28] sm:$0xff]
              %493 = vst [vmem:[%s481 + $0x28] sm:$0xff] %v492
              %v494 = vld [vmem:[%s480 + $0x30] sm:$0xff]
              %495 = vst [vmem:[%s481 + $0x30] sm:$0xff] %v494
              %v496 = vld [vmem:[%s480 + $0x38] sm:$0xff]
              %497 = vst [vmem:[%s481 + $0x38] sm:$0xff] %v496
              %v498 = vld [vmem:[%s480 + $0x40] sm:$0xff]
              %499 = vst [vmem:[%s481 + $0x40] sm:$0xff] %v498
              %v500 = vld [vmem:[%s480 + $0x48] sm:$0xff]
              %501 = vst [vmem:[%s481 + $0x48] sm:$0xff] %v500
              %v502 = vld [vmem:[%s480 + $0x50] sm:$0xff]
              %503 = vst [vmem:[%s481 + $0x50] sm:$0xff] %v502
              %v504 = vld [vmem:[%s480 + $0x58] sm:$0xff]
              %505 = vst [vmem:[%s481 + $0x58] sm:$0xff] %v504
              %v506 = vld [vmem:[%s480 + $0x60] sm:$0xff]
              %507 = vst [vmem:[%s481 + $0x60] sm:$0xff] %v506
              %v508 = vld [vmem:[%s480 + $0x68] sm:$0xff]
              %509 = vst [vmem:[%s481 + $0x68] sm:$0xff] %v508
              %v510 = vld [vmem:[%s480 + $0x70] sm:$0xff]
              %511 = vst [vmem:[%s481 + $0x70] sm:$0xff] %v510
              %v512 = vld [vmem:[%s480 + $0x78] sm:$0xff]
              %513 = vst [vmem:[%s481 + $0x78] sm:$0xff] %v512
            $region93: #{lstm_forward.1} parent=87 // loop_footer
              %s479 = sadd.s32 1, %s475
            $region94: #{lstm_forward.1} parent=87 // loop_footer_branch
              %474 = sbr.rel target = $region90
            $region95: #{lstm_forward.1} parent=87 // loop_exit
              _
          $region88: #{lstm_forward.1} parent=72 // pred_fallthru
            _
          %p514 = pneg %p470
          // Predicated region
          $region96: #{lstm_forward.1} parent=72 // pred_check
            _
          $region97: #{lstm_forward.1} parent=72 // pred_check_branch
            %516 = sbr.rel (%p470) target = $region99
          $region98: #{lstm_forward.1} parent=72 // pred_region
            %s517 = sand.u32 128, 7
          $region99: #{lstm_forward.1} parent=72 // pred_fallthru
            _
        $region73: #{lstm_forward.1} parent=31 // pred_fallthru
          _
        // Predicated region
        $region74: #{lstm_forward.1} parent=31 // pred_check
          %p455 = pneg %p451
        $region75: #{lstm_forward.1} parent=31 // pred_check_branch
          %457 = sbr.rel (%p455) target = $region77
        $region76: #{lstm_forward.1} parent=31 // pred_region
          %s458 = sshllo.u32 0, 128
          loop: start=0, step=1, limit=1
          $region78: #{lstm_forward.1} parent=76 // loop_pre_header
            _
          $region79: #{lstm_forward.1} parent=76 // loop_header
            %s460 = sphi 0, %s464
            %p461 = scmp.ge.s32.totalorder %s460, 1
            %s465 = sphi %s2, %s2
            %s466 = sphi [#allocation5], [#allocation5]
          $region80: #{lstm_forward.1} parent=76 // loop_header_branch
            %463 = sbr.rel (%p461) target = $region84
          $region81: #{lstm_forward.1} parent=76 // loop_body
            %v467 = vld [vmem:[%s465] sm:%s458]
            %468 = vst [vmem:[%s466] sm:%s458] %v467
          $region82: #{lstm_forward.1} parent=76 // loop_footer
            %s464 = sadd.s32 1, %s460
          $region83: #{lstm_forward.1} parent=76 // loop_footer_branch
            %459 = sbr.rel target = $region79
          $region84: #{lstm_forward.1} parent=76 // loop_exit
            _
        $region77: #{lstm_forward.1} parent=31 // pred_fallthru
          _
        // Predicated region
        $region100: #{lstm_forward.1} parent=31 // pred_check
          _
        $region101: #{lstm_forward.1} parent=31 // pred_check_branch
          %520 = sbr.rel (0) target = $region103
        $region102: #{lstm_forward.1} parent=31 // pred_region
          %521 = vsyncadd %s449, 2048
        $region103: #{lstm_forward.1} parent=31 // pred_fallthru
          _
        %s522 = smul.u32 4, 16
        %s523 = smul.u32 %s522, 4
        %s524 = sshll.u32 %s523, 4
        %525 = dma.done [#allocation6], %s524
        %s526 = smul.u32 128, 1
        %s527 = sshll.u32 %s526, 4
        %528 = dma.done %s449, %s527
      $region32: #{lstm_forward.1} parent=27 // pred_fallthru
        _
      %v529 = vld [vmem:[#allocation2] sm:$0xff]
      %v530 = vld [vmem:[#allocation3] sm:$0xff]
      %v531 = vld [vmem:[%s136] sm:$0xff]
      %v532 = vld [vmem:[%s136 + $0x8] sm:$0xff]
      %v533 = vld [vmem:[%s136 + $0x10] sm:$0xff]
      %v534 = vld [vmem:[%s136 + $0x18] sm:$0xff]
      %v535 = vpack.c.bf16 %v529, %v529
      %v536 = vld [vmem:[#allocation4] sm:$0xff]
      %v537 = vld [vmem:[#allocation4 + $0x8] sm:$0xff]
      %v538 = vld [vmem:[#allocation4 + $0x10] sm:$0xff]
      %v539 = vld [vmem:[#allocation4 + $0x18] sm:$0xff]
      %v540 = vld [vmem:[#allocation4 + $0x20] sm:$0xff]
      %v541 = vld [vmem:[#allocation4 + $0x28] sm:$0xff]
      %v542 = vld [vmem:[#allocation4 + $0x30] sm:$0xff]
      %v543 = vld [vmem:[#allocation4 + $0x38] sm:$0xff]
      %v544 = vld [vmem:[#allocation4 + $0x40] sm:$0xff]
      %v545 = vld [vmem:[#allocation4 + $0x48] sm:$0xff]
      %v546 = vld [vmem:[#allocation4 + $0x50] sm:$0xff]
      %v547 = vld [vmem:[#allocation4 + $0x58] sm:$0xff]
      %v548 = vld [vmem:[#allocation4 + $0x60] sm:$0xff]
      %v549 = vld [vmem:[#allocation4 + $0x68] sm:$0xff]
      %v550 = vld [vmem:[#allocation4 + $0x70] sm:$0xff]
      %v551 = vld [vmem:[#allocation4 + $0x78] sm:$0xff]
      %v552 = vld [vmem:[#allocation4 + $0x80] sm:$0xff]
      %v553 = vld [vmem:[#allocation4 + $0x88] sm:$0xff]
      %v554 = vld [vmem:[#allocation4 + $0x90] sm:$0xff]
      %v555 = vld [vmem:[#allocation4 + $0x98] sm:$0xff]
      %v556 = vld [vmem:[#allocation4 + $0xa0] sm:$0xff]
      %v557 = vld [vmem:[#allocation4 + $0xa8] sm:$0xff]
      %v558 = vld [vmem:[#allocation4 + $0xb0] sm:$0xff]
      %v559 = vld [vmem:[#allocation4 + $0xb8] sm:$0xff]
      %v560 = vld [vmem:[#allocation4 + $0xc0] sm:$0xff]
      %v561 = vld [vmem:[#allocation4 + $0xc8] sm:$0xff]
      %v562 = vld [vmem:[#allocation4 + $0xd0] sm:$0xff]
      %v563 = vld [vmem:[#allocation4 + $0xd8] sm:$0xff]
      %v564 = vld [vmem:[#allocation4 + $0xe0] sm:$0xff]
      %v565 = vld [vmem:[#allocation4 + $0xe8] sm:$0xff]
      %v566 = vld [vmem:[#allocation4 + $0xf0] sm:$0xff]
      %v567 = vld [vmem:[#allocation4 + $0xf8] sm:$0xff]
      %568 = vmatprep.subr.bf16.mxu0 %v537
      %569 = vmatpush1.bf16.msra.mxu0 %v536
      %570 = vmatprep.subr.bf16.mxu0 %v541
      %571 = vmatpush1.bf16.msra.mxu0 %v540
      %572 = vmatprep.subr.bf16.mxu0 %v545
      %573 = vmatpush1.bf16.msra.mxu0 %v544
      %574 = vmatprep.subr.bf16.mxu0 %v549
      %575 = vmatpush1.bf16.msra.mxu0 %v548
      %576 = vmatprep.subr.bf16.mxu0 %v553
      %577 = vmatpush1.bf16.msra.mxu0 %v552
      %578 = vmatprep.subr.bf16.mxu0 %v557
      %579 = vmatpush1.bf16.msra.mxu0 %v556
      %580 = vmatprep.subr.bf16.mxu0 %v561
      %581 = vmatpush1.bf16.msra.mxu0 %v560
      %582 = vmatprep.subr.bf16.mxu0 %v565
      %583 = vmatpush1.bf16.msra.mxu0 %v564
      %584 = vmatprep.subr.bf16.mxu0 0
      %585 = vmatpush1.bf16.msra.mxu0 0
      %586 = vmatprep.subr.bf16.mxu0 0
      %587 = vmatpush1.bf16.msra.mxu0 0
      %588 = vmatprep.subr.bf16.mxu0 0
      %589 = vmatpush1.bf16.msra.mxu0 0
      %590 = vmatprep.subr.bf16.mxu0 0
      %591 = vmatpush1.bf16.msra.mxu0 0
      %592 = vmatprep.subr.bf16.mxu0 0
      %593 = vmatpush1.bf16.msra.mxu0 0
      %594 = vmatprep.subr.bf16.mxu0 0
      %595 = vmatpush1.bf16.msra.mxu0 0
      %596 = vmatprep.subr.bf16.mxu0 0
      %597 = vmatpush1.bf16.msra.mxu0 0
      %598 = vmatprep.subr.bf16.mxu0 0
      %599 = vmatpush1.bf16.msra.mxu0 0
      %600 = vmatprep.mubr.bf16.mxu0 0
      %601 = vmatmul.mubr.bf16.gmra.mrb[0].mxu0 %v535
      %v602 = vpop.f32.mrb[0].mxu0
      %v603 = vadd.f32 0.0, %v602
      %v604 = vpop.f32.mrb[0].mxu0
      %v605 = vadd.f32 0.0, %v604
      %v606 = vpop.f32.mrb[0].mxu0
      %v607 = vpop.f32.mrb[0].mxu0
      %608 = vdwg.mxu0
      %609 = vmatprep.subr.bf16.mxu0 %v539
      %610 = vmatpush1.bf16.msra.mxu0 %v538
      %611 = vmatprep.subr.bf16.mxu0 %v543
      %612 = vmatpush1.bf16.msra.mxu0 %v542
      %613 = vmatprep.subr.bf16.mxu0 %v547
      %614 = vmatpush1.bf16.msra.mxu0 %v546
      %615 = vmatprep.subr.bf16.mxu0 %v551
      %616 = vmatpush1.bf16.msra.mxu0 %v550
      %617 = vmatprep.subr.bf16.mxu0 %v555
      %618 = vmatpush1.bf16.msra.mxu0 %v554
      %619 = vmatprep.subr.bf16.mxu0 %v559
      %620 = vmatpush1.bf16.msra.mxu0 %v558
      %621 = vmatprep.subr.bf16.mxu0 %v563
      %622 = vmatpush1.bf16.msra.mxu0 %v562
      %623 = vmatprep.subr.bf16.mxu0 %v567
      %624 = vmatpush1.bf16.msra.mxu0 %v566
      %625 = vmatprep.subr.bf16.mxu0 0
      %626 = vmatpush1.bf16.msra.mxu0 0
      %627 = vmatprep.subr.bf16.mxu0 0
      %628 = vmatpush1.bf16.msra.mxu0 0
      %629 = vmatprep.subr.bf16.mxu0 0
      %630 = vmatpush1.bf16.msra.mxu0 0
      %631 = vmatprep.subr.bf16.mxu0 0
      %632 = vmatpush1.bf16.msra.mxu0 0
      %633 = vmatprep.subr.bf16.mxu0 0
      %634 = vmatpush1.bf16.msra.mxu0 0
      %635 = vmatprep.subr.bf16.mxu0 0
      %636 = vmatpush1.bf16.msra.mxu0 0
      %637 = vmatprep.subr.bf16.mxu0 0
      %638 = vmatpush1.bf16.msra.mxu0 0
      %639 = vmatprep.subr.bf16.mxu0 0
      %640 = vmatpush1.bf16.msra.mxu0 0
      %641 = vmatprep.mubr.bf16.mxu0 0
      %642 = vmatmul.mubr.bf16.gmra.mrb[0].mxu0 %v535
      %v643 = vpop.f32.mrb[0].mxu0
      %v644 = vadd.f32 0.0, %v643
      %v645 = vpop.f32.mrb[0].mxu0
      %v646 = vadd.f32 0.0, %v645
      %v647 = vpop.f32.mrb[0].mxu0
      %v648 = vpop.f32.mrb[0].mxu0
      %649 = vdwg.mxu0
      %v650 = vadd.f32 %v531, %v603
      %v651 = vadd.f32 %v532, %v605
      %v652 = vadd.f32 %v533, %v644
      %v653 = vadd.f32 %v534, %v646
      %v654 = vxor.u32 %v650, 2147483648
      %v655 = vxor.u32 %v651, 2147483648
      %v656 = vxor.u32 %v652, 2147483648
      %v657 = vmul.f32 %v654, 1.442695
      %v658 = vpow.pop %v657
      %v659 = vmul.f32 %v655, 1.442695
      %v660 = vpow.pop %v659
      %v661 = vmul.f32 %v656, 1.442695
      %v662 = vpow.pop %v661
      %v663 = vadd.f32 %v658, 1.0
      %v664 = vadd.f32 %v660, 1.0
      %v665 = vadd.f32 %v662, 1.0
      %v666 = vrcp.pop %v663
      %v667 = vmul.f32 1.0, %v666
      %v668 = vrcp.pop %v664
      %v669 = vmul.f32 1.0, %v668
      %v670 = vrcp.pop %v665
      %v671 = vmul.f32 1.0, %v670
      %v672 = vtanh.pop %v653
      %v673 = vmul.f32 %v669, %v530
      %v674 = vmul.f32 %v667, %v672
      %v675 = vadd.f32 %v673, %v674
      %v676 = vtanh.pop %v675
      %v677 = vmul.f32 %v671, %v676
      %s678 = smul.u32 %s17, 8
      %p679 = scmp.lt.s32.totalorder %s678, 10
      %s680 = scalar_select %p679, 1, 0
      %v681 = vstv %s680
      %vm682 = vcmp.eq.s32.totalorder %v681, 1
      %v683 = vsel %vm682, %v675, %v530
      %v684 = vsel %vm682, %v677, %v529
      %s685 = scalar_lea.vmem %s136, 32
      %v686 = vld [vmem:[%s685] sm:$0xff]
      %v687 = vld [vmem:[%s685 + $0x8] sm:$0xff]
      %v688 = vld [vmem:[%s685 + $0x10] sm:$0xff]
      %v689 = vld [vmem:[%s685 + $0x18] sm:$0xff]
      %v690 = vpack.c.bf16 %v684, %v684
      %691 = vmatprep.subr.bf16.mxu0 %v537
      %692 = vmatpush1.bf16.msra.mxu0 %v536
      %693 = vmatprep.subr.bf16.mxu0 %v541
      %694 = vmatpush1.bf16.msra.mxu0 %v540
      %695 = vmatprep.subr.bf16.mxu0 %v545
      %696 = vmatpush1.bf16.msra.mxu0 %v544
      %697 = vmatprep.subr.bf16.mxu0 %v549
      %698 = vmatpush1.bf16.msra.mxu0 %v548
      %699 = vmatprep.subr.bf16.mxu0 %v553
      %700 = vmatpush1.bf16.msra.mxu0 %v552
      %701 = vmatprep.subr.bf16.mxu0 %v557
      %702 = vmatpush1.bf16.msra.mxu0 %v556
      %703 = vmatprep.subr.bf16.mxu0 %v561
      %704 = vmatpush1.bf16.msra.mxu0 %v560
      %705 = vmatprep.subr.bf16.mxu0 %v565
      %706 = vmatpush1.bf16.msra.mxu0 %v564
      %707 = vmatprep.subr.bf16.mxu0 0
      %708 = vmatpush1.bf16.msra.mxu0 0
      %709 = vmatprep.subr.bf16.mxu0 0
      %710 = vmatpush1.bf16.msra.mxu0 0
      %711 = vmatprep.subr.bf16.mxu0 0
      %712 = vmatpush1.bf16.msra.mxu0 0
      %713 = vmatprep.subr.bf16.mxu0 0
      %714 = vmatpush1.bf16.msra.mxu0 0
      %715 = vmatprep.subr.bf16.mxu0 0
      %716 = vmatpush1.bf16.msra.mxu0 0
      %717 = vmatprep.subr.bf16.mxu0 0
      %718 = vmatpush1.bf16.msra.mxu0 0
      %719 = vmatprep.subr.bf16.mxu0 0
      %720 = vmatpush1.bf16.msra.mxu0 0
      %721 = vmatprep.subr.bf16.mxu0 0
      %722 = vmatpush1.bf16.msra.mxu0 0
      %723 = vmatprep.mubr.bf16.mxu0 0
      %724 = vmatmul.mubr.bf16.gmra.mrb[0].mxu0 %v690
      %v725 = vpop.f32.mrb[0].mxu0
      %v726 = vadd.f32 0.0, %v725
      %v727 = vpop.f32.mrb[0].mxu0
      %v728 = vadd.f32 0.0, %v727
      %v729 = vpop.f32.mrb[0].mxu0
      %v730 = vpop.f32.mrb[0].mxu0
      %731 = vdwg.mxu0
      %732 = vmatprep.subr.bf16.mxu0 %v539
      %733 = vmatpush1.bf16.msra.mxu0 %v538
      %734 = vmatprep.subr.bf16.mxu0 %v543
      %735 = vmatpush1.bf16.msra.mxu0 %v542
      %736 = vmatprep.subr.bf16.mxu0 %v547
      %737 = vmatpush1.bf16.msra.mxu0 %v546
      %738 = vmatprep.subr.bf16.mxu0 %v551
      %739 = vmatpush1.bf16.msra.mxu0 %v550
      %740 = vmatprep.subr.bf16.mxu0 %v555
      %741 = vmatpush1.bf16.msra.mxu0 %v554
      %742 = vmatprep.subr.bf16.mxu0 %v559
      %743 = vmatpush1.bf16.msra.mxu0 %v558
      %744 = vmatprep.subr.bf16.mxu0 %v563
      %745 = vmatpush1.bf16.msra.mxu0 %v562
      %746 = vmatprep.subr.bf16.mxu0 %v567
      %747 = vmatpush1.bf16.msra.mxu0 %v566
      %748 = vmatprep.subr.bf16.mxu0 0
      %749 = vmatpush1.bf16.msra.mxu0 0
      %750 = vmatprep.subr.bf16.mxu0 0
      %751 = vmatpush1.bf16.msra.mxu0 0
      %752 = vmatprep.subr.bf16.mxu0 0
      %753 = vmatpush1.bf16.msra.mxu0 0
      %754 = vmatprep.subr.bf16.mxu0 0
      %755 = vmatpush1.bf16.msra.mxu0 0
      %756 = vmatprep.subr.bf16.mxu0 0
      %757 = vmatpush1.bf16.msra.mxu0 0
      %758 = vmatprep.subr.bf16.mxu0 0
      %759 = vmatpush1.bf16.msra.mxu0 0
      %760 = vmatprep.subr.bf16.mxu0 0
      %761 = vmatpush1.bf16.msra.mxu0 0
      %762 = vmatprep.subr.bf16.mxu0 0
      %763 = vmatpush1.bf16.msra.mxu0 0
      %764 = vmatprep.mubr.bf16.mxu0 0
      %765 = vmatmul.mubr.bf16.gmra.mrb[0].mxu0 %v690
      %v766 = vpop.f32.mrb[0].mxu0
      %v767 = vadd.f32 0.0, %v766
      %v768 = vpop.f32.mrb[0].mxu0
      %v769 = vadd.f32 0.0, %v768
      %v770 = vpop.f32.mrb[0].mxu0
      %v771 = vpop.f32.mrb[0].mxu0
      %772 = vdwg.mxu0
      %v773 = vadd.f32 %v686, %v726
      %v774 = vadd.f32 %v687, %v728
      %v775 = vadd.f32 %v688, %v767
      %v776 = vadd.f32 %v689, %v769
      %v777 = vxor.u32 %v773, 2147483648
      %v778 = vxor.u32 %v774, 2147483648
      %v779 = vxor.u32 %v775, 2147483648
      %v780 = vmul.f32 %v777, 1.442695
      %v781 = vpow.pop %v780
      %v782 = vmul.f32 %v778, 1.442695
      %v783 = vpow.pop %v782
      %v784 = vmul.f32 %v779, 1.442695
      %v785 = vpow.pop %v784
      %v786 = vadd.f32 %v781, 1.0
      %v787 = vadd.f32 %v783, 1.0
      %v788 = vadd.f32 %v785, 1.0
      %v789 = vrcp.pop %v786
      %v790 = vmul.f32 1.0, %v789
      %v791 = vrcp.pop %v787
      %v792 = vmul.f32 1.0, %v791
      %v793 = vrcp.pop %v788
      %v794 = vmul.f32 1.0, %v793
      %v795 = vtanh.pop %v776
      %v796 = vmul.f32 %v792, %v683
      %v797 = vmul.f32 %v790, %v795
      %v798 = vadd.f32 %v796, %v797
      %v799 = vtanh.pop %v798
      %v800 = vmul.f32 %v794, %v799
      %s801 = sadd.s32 %s678, 1
      %p802 = scmp.lt.s32.totalorder %s801, 10
      %s803 = scalar_select %p802, 1, 0
      %v804 = vstv %s803
      %vm805 = vcmp.eq.s32.totalorder %v804, 1
      %v806 = vsel %vm805, %v798, %v683
      %v807 = vsel %vm805, %v800, %v684
      %s808 = scalar_lea.vmem %s136, 64
      %v809 = vld [vmem:[%s808] sm:$0xff]
      %v810 = vld [vmem:[%s808 + $0x8] sm:$0xff]
      %v811 = vld [vmem:[%s808 + $0x10] sm:$0xff]
      %v812 = vld [vmem:[%s808 + $0x18] sm:$0xff]
      %v813 = vpack.c.bf16 %v807, %v807
      %814 = vmatprep.subr.bf16.mxu0 %v537
      %815 = vmatpush1.bf16.msra.mxu0 %v536
      %816 = vmatprep.subr.bf16.mxu0 %v541
      %817 = vmatpush1.bf16.msra.mxu0 %v540
      %818 = vmatprep.subr.bf16.mxu0 %v545
      %819 = vmatpush1.bf16.msra.mxu0 %v544
      %820 = vmatprep.subr.bf16.mxu0 %v549
      %821 = vmatpush1.bf16.msra.mxu0 %v548
      %822 = vmatprep.subr.bf16.mxu0 %v553
      %823 = vmatpush1.bf16.msra.mxu0 %v552
      %824 = vmatprep.subr.bf16.mxu0 %v557
      %825 = vmatpush1.bf16.msra.mxu0 %v556
      %826 = vmatprep.subr.bf16.mxu0 %v561
      %827 = vmatpush1.bf16.msra.mxu0 %v560
      %828 = vmatprep.subr.bf16.mxu0 %v565
      %829 = vmatpush1.bf16.msra.mxu0 %v564
      %830 = vmatprep.subr.bf16.mxu0 0
      %831 = vmatpush1.bf16.msra.mxu0 0
      %832 = vmatprep.subr.bf16.mxu0 0
      %833 = vmatpush1.bf16.msra.mxu0 0
      %834 = vmatprep.subr.bf16.mxu0 0
      %835 = vmatpush1.bf16.msra.mxu0 0
      %836 = vmatprep.subr.bf16.mxu0 0
      %837 = vmatpush1.bf16.msra.mxu0 0
      %838 = vmatprep.subr.bf16.mxu0 0
      %839 = vmatpush1.bf16.msra.mxu0 0
      %840 = vmatprep.subr.bf16.mxu0 0
      %841 = vmatpush1.bf16.msra.mxu0 0
      %842 = vmatprep.subr.bf16.mxu0 0
      %843 = vmatpush1.bf16.msra.mxu0 0
      %844 = vmatprep.subr.bf16.mxu0 0
      %845 = vmatpush1.bf16.msra.mxu0 0
      %846 = vmatprep.mubr.bf16.mxu0 0
      %847 = vmatmul.mubr.bf16.gmra.mrb[0].mxu0 %v813
      %v848 = vpop.f32.mrb[0].mxu0
      %v849 = vadd.f32 0.0, %v848
      %v850 = vpop.f32.mrb[0].mxu0
      %v851 = vadd.f32 0.0, %v850
      %v852 = vpop.f32.mrb[0].mxu0
      %v853 = vpop.f32.mrb[0].mxu0
      %854 = vdwg.mxu0
      %855 = vmatprep.subr.bf16.mxu0 %v539
      %856 = vmatpush1.bf16.msra.mxu0 %v538
      %857 = vmatprep.subr.bf16.mxu0 %v543
      %858 = vmatpush1.bf16.msra.mxu0 %v542
      %859 = vmatprep.subr.bf16.mxu0 %v547
      %860 = vmatpush1.bf16.msra.mxu0 %v546
      %861 = vmatprep.subr.bf16.mxu0 %v551
      %862 = vmatpush1.bf16.msra.mxu0 %v550
      %863 = vmatprep.subr.bf16.mxu0 %v555
      %864 = vmatpush1.bf16.msra.mxu0 %v554
      %865 = vmatprep.subr.bf16.mxu0 %v559
      %866 = vmatpush1.bf16.msra.mxu0 %v558
      %867 = vmatprep.subr.bf16.mxu0 %v563
      %868 = vmatpush1.bf16.msra.mxu0 %v562
      %869 = vmatprep.subr.bf16.mxu0 %v567
      %870 = vmatpush1.bf16.msra.mxu0 %v566
      %871 = vmatprep.subr.bf16.mxu0 0
      %872 = vmatpush1.bf16.msra.mxu0 0
      %873 = vmatprep.subr.bf16.mxu0 0
      %874 = vmatpush1.bf16.msra.mxu0 0
      %875 = vmatprep.subr.bf16.mxu0 0
      %876 = vmatpush1.bf16.msra.mxu0 0
      %877 = vmatprep.subr.bf16.mxu0 0
      %878 = vmatpush1.bf16.msra.mxu0 0
      %879 = vmatprep.subr.bf16.mxu0 0
      %880 = vmatpush1.bf16.msra.mxu0 0
      %881 = vmatprep.subr.bf16.mxu0 0
      %882 = vmatpush1.bf16.msra.mxu0 0
      %883 = vmatprep.subr.bf16.mxu0 0
      %884 = vmatpush1.bf16.msra.mxu0 0
      %885 = vmatprep.subr.bf16.mxu0 0
      %886 = vmatpush1.bf16.msra.mxu0 0
      %887 = vmatprep.mubr.bf16.mxu0 0
      %888 = vmatmul.mubr.bf16.gmra.mrb[0].mxu0 %v813
      %v889 = vpop.f32.mrb[0].mxu0
      %v890 = vadd.f32 0.0, %v889
      %v891 = vpop.f32.mrb[0].mxu0
      %v892 = vadd.f32 0.0, %v891
      %v893 = vpop.f32.mrb[0].mxu0
      %v894 = vpop.f32.mrb[0].mxu0
      %895 = vdwg.mxu0
      %v896 = vadd.f32 %v809, %v849
      %v897 = vadd.f32 %v810, %v851
      %v898 = vadd.f32 %v811, %v890
      %v899 = vadd.f32 %v812, %v892
      %v900 = vxor.u32 %v896, 2147483648
      %v901 = vxor.u32 %v897, 2147483648
      %v902 = vxor.u32 %v898, 2147483648
      %v903 = vmul.f32 %v900, 1.442695
      %v904 = vpow.pop %v903
      %v905 = vmul.f32 %v901, 1.442695
      %v906 = vpow.pop %v905
      %v907 = vmul.f32 %v902, 1.442695
      %v908 = vpow.pop %v907
      %v909 = vadd.f32 %v904, 1.0
      %v910 = vadd.f32 %v906, 1.0
      %v911 = vadd.f32 %v908, 1.0
      %v912 = vrcp.pop %v909
      %v913 = vmul.f32 1.0, %v912
      %v914 = vrcp.pop %v910
      %v915 = vmul.f32 1.0, %v914
      %v916 = vrcp.pop %v911
      %v917 = vmul.f32 1.0, %v916
      %v918 = vtanh.pop %v899
      %v919 = vmul.f32 %v915, %v806
      %v920 = vmul.f32 %v913, %v918
      %v921 = vadd.f32 %v919, %v920
      %v922 = vtanh.pop %v921
      %v923 = vmul.f32 %v917, %v922
      %s924 = sadd.s32 %s678, 2
      %p925 = scmp.lt.s32.totalorder %s924, 10
      %s926 = scalar_select %p925, 1, 0
      %v927 = vstv %s926
      %vm928 = vcmp.eq.s32.totalorder %v927, 1
      %v929 = vsel %vm928, %v921, %v806
      %v930 = vsel %vm928, %v923, %v807
      %s931 = scalar_lea.vmem %s136, 96
      %v932 = vld [vmem:[%s931] sm:$0xff]
      %v933 = vld [vmem:[%s931 + $0x8] sm:$0xff]
      %v934 = vld [vmem:[%s931 + $0x10] sm:$0xff]
      %v935 = vld [vmem:[%s931 + $0x18] sm:$0xff]
      %v936 = vpack.c.bf16 %v930, %v930
      %937 = vmatprep.subr.bf16.mxu0 %v537
      %938 = vmatpush1.bf16.msra.mxu0 %v536
      %939 = vmatprep.subr.bf16.mxu0 %v541
      %940 = vmatpush1.bf16.msra.mxu0 %v540
      %941 = vmatprep.subr.bf16.mxu0 %v545
      %942 = vmatpush1.bf16.msra.mxu0 %v544
      %943 = vmatprep.subr.bf16.mxu0 %v549
      %944 = vmatpush1.bf16.msra.mxu0 %v548
      %945 = vmatprep.subr.bf16.mxu0 %v553
      %946 = vmatpush1.bf16.msra.mxu0 %v552
      %947 = vmatprep.subr.bf16.mxu0 %v557
      %948 = vmatpush1.bf16.msra.mxu0 %v556
      %949 = vmatprep.subr.bf16.mxu0 %v561
      %950 = vmatpush1.bf16.msra.mxu0 %v560
      %951 = vmatprep.subr.bf16.mxu0 %v565
      %952 = vmatpush1.bf16.msra.mxu0 %v564
      %953 = vmatprep.subr.bf16.mxu0 0
      %954 = vmatpush1.bf16.msra.mxu0 0
      %955 = vmatprep.subr.bf16.mxu0 0
      %956 = vmatpush1.bf16.msra.mxu0 0
      %957 = vmatprep.subr.bf16.mxu0 0
      %958 = vmatpush1.bf16.msra.mxu0 0
      %959 = vmatprep.subr.bf16.mxu0 0
      %960 = vmatpush1.bf16.msra.mxu0 0
      %961 = vmatprep.subr.bf16.mxu0 0
      %962 = vmatpush1.bf16.msra.mxu0 0
      %963 = vmatprep.subr.bf16.mxu0 0
      %964 = vmatpush1.bf16.msra.mxu0 0
      %965 = vmatprep.subr.bf16.mxu0 0
      %966 = vmatpush1.bf16.msra.mxu0 0
      %967 = vmatprep.subr.bf16.mxu0 0
      %968 = vmatpush1.bf16.msra.mxu0 0
      %969 = vmatprep.mubr.bf16.mxu0 0
      %970 = vmatmul.mubr.bf16.gmra.mrb[0].mxu0 %v936
      %v971 = vpop.f32.mrb[0].mxu0
      %v972 = vadd.f32 0.0, %v971
      %v973 = vpop.f32.mrb[0].mxu0
      %v974 = vadd.f32 0.0, %v973
      %v975 = vpop.f32.mrb[0].mxu0
      %v976 = vpop.f32.mrb[0].mxu0
      %977 = vdwg.mxu0
      %978 = vmatprep.subr.bf16.mxu0 %v539
      %979 = vmatpush1.bf16.msra.mxu0 %v538
      %980 = vmatprep.subr.bf16.mxu0 %v543
      %981 = vmatpush1.bf16.msra.mxu0 %v542
      %982 = vmatprep.subr.bf16.mxu0 %v547
      %983 = vmatpush1.bf16.msra.mxu0 %v546
      %984 = vmatprep.subr.bf16.mxu0 %v551
      %985 = vmatpush1.bf16.msra.mxu0 %v550
      %986 = vmatprep.subr.bf16.mxu0 %v555
      %987 = vmatpush1.bf16.msra.mxu0 %v554
      %988 = vmatprep.subr.bf16.mxu0 %v559
      %989 = vmatpush1.bf16.msra.mxu0 %v558
      %990 = vmatprep.subr.bf16.mxu0 %v563
      %991 = vmatpush1.bf16.msra.mxu0 %v562
      %992 = vmatprep.subr.bf16.mxu0 %v567
      %993 = vmatpush1.bf16.msra.mxu0 %v566
      %994 = vmatprep.subr.bf16.mxu0 0
      %995 = vmatpush1.bf16.msra.mxu0 0
      %996 = vmatprep.subr.bf16.mxu0 0
      %997 = vmatpush1.bf16.msra.mxu0 0
      %998 = vmatprep.subr.bf16.mxu0 0
      %999 = vmatpush1.bf16.msra.mxu0 0
      %1000 = vmatprep.subr.bf16.mxu0 0
      %1001 = vmatpush1.bf16.msra.mxu0 0
      %1002 = vmatprep.subr.bf16.mxu0 0
      %1003 = vmatpush1.bf16.msra.mxu0 0
      %1004 = vmatprep.subr.bf16.mxu0 0
      %1005 = vmatpush1.bf16.msra.mxu0 0
      %1006 = vmatprep.subr.bf16.mxu0 0
      %1007 = vmatpush1.bf16.msra.mxu0 0
      %1008 = vmatprep.subr.bf16.mxu0 0
      %1009 = vmatpush1.bf16.msra.mxu0 0
      %1010 = vmatprep.mubr.bf16.mxu0 0
      %1011 = vmatmul.mubr.bf16.gmra.mrb[0].mxu0 %v936
      %v1012 = vpop.f32.mrb[0].mxu0
      %v1013 = vadd.f32 0.0, %v1012
      %v1014 = vpop.f32.mrb[0].mxu0
      %v1015 = vadd.f32 0.0, %v1014
      %v1016 = vpop.f32.mrb[0].mxu0
      %v1017 = vpop.f32.mrb[0].mxu0
      %1018 = vdwg.mxu0
      %v1019 = vadd.f32 %v932, %v972
      %v1020 = vadd.f32 %v933, %v974
      %v1021 = vadd.f32 %v934, %v1013
      %v1022 = vadd.f32 %v935, %v1015
      %v1023 = vxor.u32 %v1019, 2147483648
      %v1024 = vxor.u32 %v1020, 2147483648
      %v1025 = vxor.u32 %v1021, 2147483648
      %v1026 = vmul.f32 %v1023, 1.442695
      %v1027 = vpow.pop %v1026
      %v1028 = vmul.f32 %v1024, 1.442695
      %v1029 = vpow.pop %v1028
      %v1030 = vmul.f32 %v1025, 1.442695
      %v1031 = vpow.pop %v1030
      %v1032 = vadd.f32 %v1027, 1.0
      %v1033 = vadd.f32 %v1029, 1.0
      %v1034 = vadd.f32 %v1031, 1.0
      %v1035 = vrcp.pop %v1032
      %v1036 = vmul.f32 1.0, %v1035
      %v1037 = vrcp.pop %v1033
      %v1038 = vmul.f32 1.0, %v1037
      %v1039 = vrcp.pop %v1034
      %v1040 = vmul.f32 1.0, %v1039
      %v1041 = vtanh.pop %v1022
      %v1042 = vmul.f32 %v1038, %v929
      %v1043 = vmul.f32 %v1036, %v1041
      %v1044 = vadd.f32 %v1042, %v1043
      %v1045 = vtanh.pop %v1044
      %v1046 = vmul.f32 %v1040, %v1045
      %s1047 = sadd.s32 %s678, 3
      %p1048 = scmp.lt.s32.totalorder %s1047, 10
      %s1049 = scalar_select %p1048, 1, 0
      %v1050 = vstv %s1049
      %vm1051 = vcmp.eq.s32.totalorder %v1050, 1
      %v1052 = vsel %vm1051, %v1044, %v929
      %v1053 = vsel %vm1051, %v1046, %v930
      %s1054 = scalar_lea.vmem %s136, 128
      %v1055 = vld [vmem:[%s1054] sm:$0xff]
      %v1056 = vld [vmem:[%s1054 + $0x8] sm:$0xff]
      %v1057 = vld [vmem:[%s1054 + $0x10] sm:$0xff]
      %v1058 = vld [vmem:[%s1054 + $0x18] sm:$0xff]
      %v1059 = vpack.c.bf16 %v1053, %v1053
      %1060 = vmatprep.subr.bf16.mxu0 %v537
      %1061 = vmatpush1.bf16.msra.mxu0 %v536
      %1062 = vmatprep.subr.bf16.mxu0 %v541
      %1063 = vmatpush1.bf16.msra.mxu0 %v540
      %1064 = vmatprep.subr.bf16.mxu0 %v545
      %1065 = vmatpush1.bf16.msra.mxu0 %v544
      %1066 = vmatprep.subr.bf16.mxu0 %v549
      %1067 = vmatpush1.bf16.msra.mxu0 %v548
      %1068 = vmatprep.subr.bf16.mxu0 %v553
      %1069 = vmatpush1.bf16.msra.mxu0 %v552
      %1070 = vmatprep.subr.bf16.mxu0 %v557
      %1071 = vmatpush1.bf16.msra.mxu0 %v556
      %1072 = vmatprep.subr.bf16.mxu0 %v561
      %1073 = vmatpush1.bf16.msra.mxu0 %v560
      %1074 = vmatprep.subr.bf16.mxu0 %v565
      %1075 = vmatpush1.bf16.msra.mxu0 %v564
      %1076 = vmatprep.subr.bf16.mxu0 0
      %1077 = vmatpush1.bf16.msra.mxu0 0
      %1078 = vmatprep.subr.bf16.mxu0 0
      %1079 = vmatpush1.bf16.msra.mxu0 0
      %1080 = vmatprep.subr.bf16.mxu0 0
      %1081 = vmatpush1.bf16.msra.mxu0 0
      %1082 = vmatprep.subr.bf16.mxu0 0
      %1083 = vmatpush1.bf16.msra.mxu0 0
      %1084 = vmatprep.subr.bf16.mxu0 0
      %1085 = vmatpush1.bf16.msra.mxu0 0
      %1086 = vmatprep.subr.bf16.mxu0 0
      %1087 = vmatpush1.bf16.msra.mxu0 0
      %1088 = vmatprep.subr.bf16.mxu0 0
      %1089 = vmatpush1.bf16.msra.mxu0 0
      %1090 = vmatprep.subr.bf16.mxu0 0
      %1091 = vmatpush1.bf16.msra.mxu0 0
      %1092 = vmatprep.mubr.bf16.mxu0 0
      %1093 = vmatmul.mubr.bf16.gmra.mrb[0].mxu0 %v1059
      %v1094 = vpop.f32.mrb[0].mxu0
      %v1095 = vadd.f32 0.0, %v1094
      %v1096 = vpop.f32.mrb[0].mxu0
      %v1097 = vadd.f32 0.0, %v1096
      %v1098 = vpop.f32.mrb[0].mxu0
      %v1099 = vpop.f32.mrb[0].mxu0
      %1100 = vdwg.mxu0
      %1101 = vmatprep.subr.bf16.mxu0 %v539
      %1102 = vmatpush1.bf16.msra.mxu0 %v538
      %1103 = vmatprep.subr.bf16.mxu0 %v543
      %1104 = vmatpush1.bf16.msra.mxu0 %v542
      %1105 = vmatprep.subr.bf16.mxu0 %v547
      %1106 = vmatpush1.bf16.msra.mxu0 %v546
      %1107 = vmatprep.subr.bf16.mxu0 %v551
      %1108 = vmatpush1.bf16.msra.mxu0 %v550
      %1109 = vmatprep.subr.bf16.mxu0 %v555
      %1110 = vmatpush1.bf16.msra.mxu0 %v554
      %1111 = vmatprep.subr.bf16.mxu0 %v559
      %1112 = vmatpush1.bf16.msra.mxu0 %v558
      %1113 = vmatprep.subr.bf16.mxu0 %v563
      %1114 = vmatpush1.bf16.msra.mxu0 %v562
      %1115 = vmatprep.subr.bf16.mxu0 %v567
      %1116 = vmatpush1.bf16.msra.mxu0 %v566
      %1117 = vmatprep.subr.bf16.mxu0 0
      %1118 = vmatpush1.bf16.msra.mxu0 0
      %1119 = vmatprep.subr.bf16.mxu0 0
      %1120 = vmatpush1.bf16.msra.mxu0 0
      %1121 = vmatprep.subr.bf16.mxu0 0
      %1122 = vmatpush1.bf16.msra.mxu0 0
      %1123 = vmatprep.subr.bf16.mxu0 0
      %1124 = vmatpush1.bf16.msra.mxu0 0
      %1125 = vmatprep.subr.bf16.mxu0 0
      %1126 = vmatpush1.bf16.msra.mxu0 0
      %1127 = vmatprep.subr.bf16.mxu0 0
      %1128 = vmatpush1.bf16.msra.mxu0 0
      %1129 = vmatprep.subr.bf16.mxu0 0
      %1130 = vmatpush1.bf16.msra.mxu0 0
      %1131 = vmatprep.subr.bf16.mxu0 0
      %1132 = vmatpush1.bf16.msra.mxu0 0
      %1133 = vmatprep.mubr.bf16.mxu0 0
      %1134 = vmatmul.mubr.bf16.gmra.mrb[0].mxu0 %v1059
      %v1135 = vpop.f32.mrb[0].mxu0
      %v1136 = vadd.f32 0.0, %v1135
      %v1137 = vpop.f32.mrb[0].mxu0
      %v1138 = vadd.f32 0.0, %v1137
      %v1139 = vpop.f32.mrb[0].mxu0
      %v1140 = vpop.f32.mrb[0].mxu0
      %1141 = vdwg.mxu0
      %v1142 = vadd.f32 %v1055, %v1095
      %v1143 = vadd.f32 %v1056, %v1097
      %v1144 = vadd.f32 %v1057, %v1136
      %v1145 = vadd.f32 %v1058, %v1138
      %v1146 = vxor.u32 %v1142, 2147483648
      %v1147 = vxor.u32 %v1143, 2147483648
      %v1148 = vxor.u32 %v1144, 2147483648
      %v1149 = vmul.f32 %v1146, 1.442695
      %v1150 = vpow.pop %v1149
      %v1151 = vmul.f32 %v1147, 1.442695
      %v1152 = vpow.pop %v1151
      %v1153 = vmul.f32 %v1148, 1.442695
      %v1154 = vpow.pop %v1153
      %v1155 = vadd.f32 %v1150, 1.0
      %v1156 = vadd.f32 %v1152, 1.0
      %v1157 = vadd.f32 %v1154, 1.0
      %v1158 = vrcp.pop %v1155
      %v1159 = vmul.f32 1.0, %v1158
      %v1160 = vrcp.pop %v1156
      %v1161 = vmul.f32 1.0, %v1160
      %v1162 = vrcp.pop %v1157
      %v1163 = vmul.f32 1.0, %v1162
      %v1164 = vtanh.pop %v1145
      %v1165 = vmul.f32 %v1161, %v1052
      %v1166 = vmul.f32 %v1159, %v1164
      %v1167 = vadd.f32 %v1165, %v1166
      %v1168 = vtanh.pop %v1167
      %v1169 = vmul.f32 %v1163, %v1168
      %s1170 = sadd.s32 %s678, 4
      %p1171 = scmp.lt.s32.totalorder %s1170, 10
      %s1172 = scalar_select %p1171, 1, 0
      %v1173 = vstv %s1172
      %vm1174 = vcmp.eq.s32.totalorder %v1173, 1
      %v1175 = vsel %vm1174, %v1167, %v1052
      %v1176 = vsel %vm1174, %v1169, %v1053
      %s1177 = scalar_lea.vmem %s136, 160
      %v1178 = vld [vmem:[%s1177] sm:$0xff]
      %v1179 = vld [vmem:[%s1177 + $0x8] sm:$0xff]
      %v1180 = vld [vmem:[%s1177 + $0x10] sm:$0xff]
      %v1181 = vld [vmem:[%s1177 + $0x18] sm:$0xff]
      %v1182 = vpack.c.bf16 %v1176, %v1176
      %1183 = vmatprep.subr.bf16.mxu0 %v537
      %1184 = vmatpush1.bf16.msra.mxu0 %v536
      %1185 = vmatprep.subr.bf16.mxu0 %v541
      %1186 = vmatpush1.bf16.msra.mxu0 %v540
      %1187 = vmatprep.subr.bf16.mxu0 %v545
      %1188 = vmatpush1.bf16.msra.mxu0 %v544
      %1189 = vmatprep.subr.bf16.mxu0 %v549
      %1190 = vmatpush1.bf16.msra.mxu0 %v548
      %1191 = vmatprep.subr.bf16.mxu0 %v553
      %1192 = vmatpush1.bf16.msra.mxu0 %v552
      %1193 = vmatprep.subr.bf16.mxu0 %v557
      %1194 = vmatpush1.bf16.msra.mxu0 %v556
      %1195 = vmatprep.subr.bf16.mxu0 %v561
      %1196 = vmatpush1.bf16.msra.mxu0 %v560
      %1197 = vmatprep.subr.bf16.mxu0 %v565
      %1198 = vmatpush1.bf16.msra.mxu0 %v564
      %1199 = vmatprep.subr.bf16.mxu0 0
      %1200 = vmatpush1.bf16.msra.mxu0 0
      %1201 = vmatprep.subr.bf16.mxu0 0
      %1202 = vmatpush1.bf16.msra.mxu0 0
      %1203 = vmatprep.subr.bf16.mxu0 0
      %1204 = vmatpush1.bf16.msra.mxu0 0
      %1205 = vmatprep.subr.bf16.mxu0 0
      %1206 = vmatpush1.bf16.msra.mxu0 0
      %1207 = vmatprep.subr.bf16.mxu0 0
      %1208 = vmatpush1.bf16.msra.mxu0 0
      %1209 = vmatprep.subr.bf16.mxu0 0
      %1210 = vmatpush1.bf16.msra.mxu0 0
      %1211 = vmatprep.subr.bf16.mxu0 0
      %1212 = vmatpush1.bf16.msra.mxu0 0
      %1213 = vmatprep.subr.bf16.mxu0 0
      %1214 = vmatpush1.bf16.msra.mxu0 0
      %1215 = vmatprep.mubr.bf16.mxu0 0
      %1216 = vmatmul.mubr.bf16.gmra.mrb[0].mxu0 %v1182
      %v1217 = vpop.f32.mrb[0].mxu0
      %v1218 = vadd.f32 0.0, %v1217
      %v1219 = vpop.f32.mrb[0].mxu0
      %v1220 = vadd.f32 0.0, %v1219
      %v1221 = vpop.f32.mrb[0].mxu0
      %v1222 = vpop.f32.mrb[0].mxu0
      %1223 = vdwg.mxu0
      %1224 = vmatprep.subr.bf16.mxu0 %v539
      %1225 = vmatpush1.bf16.msra.mxu0 %v538
      %1226 = vmatprep.subr.bf16.mxu0 %v543
      %1227 = vmatpush1.bf16.msra.mxu0 %v542
      %1228 = vmatprep.subr.bf16.mxu0 %v547
      %1229 = vmatpush1.bf16.msra.mxu0 %v546
      %1230 = vmatprep.subr.bf16.mxu0 %v551
      %1231 = vmatpush1.bf16.msra.mxu0 %v550
      %1232 = vmatprep.subr.bf16.mxu0 %v555
      %1233 = vmatpush1.bf16.msra.mxu0 %v554
      %1234 = vmatprep.subr.bf16.mxu0 %v559
      %1235 = vmatpush1.bf16.msra.mxu0 %v558
      %1236 = vmatprep.subr.bf16.mxu0 %v563
      %1237 = vmatpush1.bf16.msra.mxu0 %v562
      %1238 = vmatprep.subr.bf16.mxu0 %v567
      %1239 = vmatpush1.bf16.msra.mxu0 %v566
      %1240 = vmatprep.subr.bf16.mxu0 0
      %1241 = vmatpush1.bf16.msra.mxu0 0
      %1242 = vmatprep.subr.bf16.mxu0 0
      %1243 = vmatpush1.bf16.msra.mxu0 0
      %1244 = vmatprep.subr.bf16.mxu0 0
      %1245 = vmatpush1.bf16.msra.mxu0 0
      %1246 = vmatprep.subr.bf16.mxu0 0
      %1247 = vmatpush1.bf16.msra.mxu0 0
      %1248 = vmatprep.subr.bf16.mxu0 0
      %1249 = vmatpush1.bf16.msra.mxu0 0
      %1250 = vmatprep.subr.bf16.mxu0 0
      %1251 = vmatpush1.bf16.msra.mxu0 0
      %1252 = vmatprep.subr.bf16.mxu0 0
      %1253 = vmatpush1.bf16.msra.mxu0 0
      %1254 = vmatprep.subr.bf16.mxu0 0
      %1255 = vmatpush1.bf16.msra.mxu0 0
      %1256 = vmatprep.mubr.bf16.mxu0 0
      %1257 = vmatmul.mubr.bf16.gmra.mrb[0].mxu0 %v1182
      %v1258 = vpop.f32.mrb[0].mxu0
      %v1259 = vadd.f32 0.0, %v1258
      %v1260 = vpop.f32.mrb[0].mxu0
      %v1261 = vadd.f32 0.0, %v1260
      %v1262 = vpop.f32.mrb[0].mxu0
      %v1263 = vpop.f32.mrb[0].mxu0
      %1264 = vdwg.mxu0
      %v1265 = vadd.f32 %v1178, %v1218
      %v1266 = vadd.f32 %v1179, %v1220
      %v1267 = vadd.f32 %v1180, %v1259
      %v1268 = vadd.f32 %v1181, %v1261
      %v1269 = vxor.u32 %v1265, 2147483648
      %v1270 = vxor.u32 %v1266, 2147483648
      %v1271 = vxor.u32 %v1267, 2147483648
      %v1272 = vmul.f32 %v1269, 1.442695
      %v1273 = vpow.pop %v1272
      %v1274 = vmul.f32 %v1270, 1.442695
      %v1275 = vpow.pop %v1274
      %v1276 = vmul.f32 %v1271, 1.442695
      %v1277 = vpow.pop %v1276
      %v1278 = vadd.f32 %v1273, 1.0
      %v1279 = vadd.f32 %v1275, 1.0
      %v1280 = vadd.f32 %v1277, 1.0
      %v1281 = vrcp.pop %v1278
      %v1282 = vmul.f32 1.0, %v1281
      %v1283 = vrcp.pop %v1279
      %v1284 = vmul.f32 1.0, %v1283
      %v1285 = vrcp.pop %v1280
      %v1286 = vmul.f32 1.0, %v1285
      %v1287 = vtanh.pop %v1268
      %v1288 = vmul.f32 %v1284, %v1175
      %v1289 = vmul.f32 %v1282, %v1287
      %v1290 = vadd.f32 %v1288, %v1289
      %v1291 = vtanh.pop %v1290
      %v1292 = vmul.f32 %v1286, %v1291
      %s1293 = sadd.s32 %s678, 5
      %p1294 = scmp.lt.s32.totalorder %s1293, 10
      %s1295 = scalar_select %p1294, 1, 0
      %v1296 = vstv %s1295
      %vm1297 = vcmp.eq.s32.totalorder %v1296, 1
      %v1298 = vsel %vm1297, %v1290, %v1175
      %v1299 = vsel %vm1297, %v1292, %v1176
      %s1300 = scalar_lea.vmem %s136, 192
      %v1301 = vld [vmem:[%s1300] sm:$0xff]
      %v1302 = vld [vmem:[%s1300 + $0x8] sm:$0xff]
      %v1303 = vld [vmem:[%s1300 + $0x10] sm:$0xff]
      %v1304 = vld [vmem:[%s1300 + $0x18] sm:$0xff]
      %v1305 = vpack.c.bf16 %v1299, %v1299
      %1306 = vmatprep.subr.bf16.mxu0 %v537
      %1307 = vmatpush1.bf16.msra.mxu0 %v536
      %1308 = vmatprep.subr.bf16.mxu0 %v541
      %1309 = vmatpush1.bf16.msra.mxu0 %v540
      %1310 = vmatprep.subr.bf16.mxu0 %v545
      %1311 = vmatpush1.bf16.msra.mxu0 %v544
      %1312 = vmatprep.subr.bf16.mxu0 %v549
      %1313 = vmatpush1.bf16.msra.mxu0 %v548
      %1314 = vmatprep.subr.bf16.mxu0 %v553
      %1315 = vmatpush1.bf16.msra.mxu0 %v552
      %1316 = vmatprep.subr.bf16.mxu0 %v557
      %1317 = vmatpush1.bf16.msra.mxu0 %v556
      %1318 = vmatprep.subr.bf16.mxu0 %v561
      %1319 = vmatpush1.bf16.msra.mxu0 %v560
      %1320 = vmatprep.subr.bf16.mxu0 %v565
      %1321 = vmatpush1.bf16.msra.mxu0 %v564
      %1322 = vmatprep.subr.bf16.mxu0 0
      %1323 = vmatpush1.bf16.msra.mxu0 0
      %1324 = vmatprep.subr.bf16.mxu0 0
      %1325 = vmatpush1.bf16.msra.mxu0 0
      %1326 = vmatprep.subr.bf16.mxu0 0
      %1327 = vmatpush1.bf16.msra.mxu0 0
      %1328 = vmatprep.subr.bf16.mxu0 0
      %1329 = vmatpush1.bf16.msra.mxu0 0
      %1330 = vmatprep.subr.bf16.mxu0 0
      %1331 = vmatpush1.bf16.msra.mxu0 0
      %1332 = vmatprep.subr.bf16.mxu0 0
      %1333 = vmatpush1.bf16.msra.mxu0 0
      %1334 = vmatprep.subr.bf16.mxu0 0
      %1335 = vmatpush1.bf16.msra.mxu0 0
      %1336 = vmatprep.subr.bf16.mxu0 0
      %1337 = vmatpush1.bf16.msra.mxu0 0
      %1338 = vmatprep.mubr.bf16.mxu0 0
      %1339 = vmatmul.mubr.bf16.gmra.mrb[0].mxu0 %v1305
      %v1340 = vpop.f32.mrb[0].mxu0
      %v1341 = vadd.f32 0.0, %v1340
      %v1342 = vpop.f32.mrb[0].mxu0
      %v1343 = vadd.f32 0.0, %v1342
      %v1344 = vpop.f32.mrb[0].mxu0
      %v1345 = vpop.f32.mrb[0].mxu0
      %1346 = vdwg.mxu0
      %1347 = vmatprep.subr.bf16.mxu0 %v539
      %1348 = vmatpush1.bf16.msra.mxu0 %v538
      %1349 = vmatprep.subr.bf16.mxu0 %v543
      %1350 = vmatpush1.bf16.msra.mxu0 %v542
      %1351 = vmatprep.subr.bf16.mxu0 %v547
      %1352 = vmatpush1.bf16.msra.mxu0 %v546
      %1353 = vmatprep.subr.bf16.mxu0 %v551
      %1354 = vmatpush1.bf16.msra.mxu0 %v550
      %1355 = vmatprep.subr.bf16.mxu0 %v555
      %1356 = vmatpush1.bf16.msra.mxu0 %v554
      %1357 = vmatprep.subr.bf16.mxu0 %v559
      %1358 = vmatpush1.bf16.msra.mxu0 %v558
      %1359 = vmatprep.subr.bf16.mxu0 %v563
      %1360 = vmatpush1.bf16.msra.mxu0 %v562
      %1361 = vmatprep.subr.bf16.mxu0 %v567
      %1362 = vmatpush1.bf16.msra.mxu0 %v566
      %1363 = vmatprep.subr.bf16.mxu0 0
      %1364 = vmatpush1.bf16.msra.mxu0 0
      %1365 = vmatprep.subr.bf16.mxu0 0
      %1366 = vmatpush1.bf16.msra.mxu0 0
      %1367 = vmatprep.subr.bf16.mxu0 0
      %1368 = vmatpush1.bf16.msra.mxu0 0
      %1369 = vmatprep.subr.bf16.mxu0 0
      %1370 = vmatpush1.bf16.msra.mxu0 0
      %1371 = vmatprep.subr.bf16.mxu0 0
      %1372 = vmatpush1.bf16.msra.mxu0 0
      %1373 = vmatprep.subr.bf16.mxu0 0
      %1374 = vmatpush1.bf16.msra.mxu0 0
      %1375 = vmatprep.subr.bf16.mxu0 0
      %1376 = vmatpush1.bf16.msra.mxu0 0
      %1377 = vmatprep.subr.bf16.mxu0 0
      %1378 = vmatpush1.bf16.msra.mxu0 0
      %1379 = vmatprep.mubr.bf16.mxu0 0
      %1380 = vmatmul.mubr.bf16.gmra.mrb[0].mxu0 %v1305
      %v1381 = vpop.f32.mrb[0].mxu0
      %v1382 = vadd.f32 0.0, %v1381
      %v1383 = vpop.f32.mrb[0].mxu0
      %v1384 = vadd.f32 0.0, %v1383
      %v1385 = vpop.f32.mrb[0].mxu0
      %v1386 = vpop.f32.mrb[0].mxu0
      %1387 = vdwg.mxu0
      %v1388 = vadd.f32 %v1301, %v1341
      %v1389 = vadd.f32 %v1302, %v1343
      %v1390 = vadd.f32 %v1303, %v1382
      %v1391 = vadd.f32 %v1304, %v1384
      %v1392 = vxor.u32 %v1388, 2147483648
      %v1393 = vxor.u32 %v1389, 2147483648
      %v1394 = vxor.u32 %v1390, 2147483648
      %v1395 = vmul.f32 %v1392, 1.442695
      %v1396 = vpow.pop %v1395
      %v1397 = vmul.f32 %v1393, 1.442695
      %v1398 = vpow.pop %v1397
      %v1399 = vmul.f32 %v1394, 1.442695
      %v1400 = vpow.pop %v1399
      %v1401 = vadd.f32 %v1396, 1.0
      %v1402 = vadd.f32 %v1398, 1.0
      %v1403 = vadd.f32 %v1400, 1.0
      %v1404 = vrcp.pop %v1401
      %v1405 = vmul.f32 1.0, %v1404
      %v1406 = vrcp.pop %v1402
      %v1407 = vmul.f32 1.0, %v1406
      %v1408 = vrcp.pop %v1403
      %v1409 = vmul.f32 1.0, %v1408
      %v1410 = vtanh.pop %v1391
      %v1411 = vmul.f32 %v1407, %v1298
      %v1412 = vmul.f32 %v1405, %v1410
      %v1413 = vadd.f32 %v1411, %v1412
      %v1414 = vtanh.pop %v1413
      %v1415 = vmul.f32 %v1409, %v1414
      %s1416 = sadd.s32 %s678, 6
      %p1417 = scmp.lt.s32.totalorder %s1416, 10
      %s1418 = scalar_select %p1417, 1, 0
      %v1419 = vstv %s1418
      %vm1420 = vcmp.eq.s32.totalorder %v1419, 1
      %v1421 = vsel %vm1420, %v1413, %v1298
      %v1422 = vsel %vm1420, %v1415, %v1299
      %s1423 = scalar_lea.vmem %s136, 224
      %v1424 = vld [vmem:[%s1423] sm:$0xff]
      %v1425 = vld [vmem:[%s1423 + $0x8] sm:$0xff]
      %v1426 = vld [vmem:[%s1423 + $0x10] sm:$0xff]
      %v1427 = vld [vmem:[%s1423 + $0x18] sm:$0xff]
      %v1428 = vpack.c.bf16 %v1422, %v1422
      %1429 = vmatprep.subr.bf16.mxu0 %v537
      %1430 = vmatpush1.bf16.msra.mxu0 %v536
      %1431 = vmatprep.subr.bf16.mxu0 %v541
      %1432 = vmatpush1.bf16.msra.mxu0 %v540
      %1433 = vmatprep.subr.bf16.mxu0 %v545
      %1434 = vmatpush1.bf16.msra.mxu0 %v544
      %1435 = vmatprep.subr.bf16.mxu0 %v549
      %1436 = vmatpush1.bf16.msra.mxu0 %v548
      %1437 = vmatprep.subr.bf16.mxu0 %v553
      %1438 = vmatpush1.bf16.msra.mxu0 %v552
      %1439 = vmatprep.subr.bf16.mxu0 %v557
      %1440 = vmatpush1.bf16.msra.mxu0 %v556
      %1441 = vmatprep.subr.bf16.mxu0 %v561
      %1442 = vmatpush1.bf16.msra.mxu0 %v560
      %1443 = vmatprep.subr.bf16.mxu0 %v565
      %1444 = vmatpush1.bf16.msra.mxu0 %v564
      %1445 = vmatprep.subr.bf16.mxu0 0
      %1446 = vmatpush1.bf16.msra.mxu0 0
      %1447 = vmatprep.subr.bf16.mxu0 0
      %1448 = vmatpush1.bf16.msra.mxu0 0
      %1449 = vmatprep.subr.bf16.mxu0 0
      %1450 = vmatpush1.bf16.msra.mxu0 0
      %1451 = vmatprep.subr.bf16.mxu0 0
      %1452 = vmatpush1.bf16.msra.mxu0 0
      %1453 = vmatprep.subr.bf16.mxu0 0
      %1454 = vmatpush1.bf16.msra.mxu0 0
      %1455 = vmatprep.subr.bf16.mxu0 0
      %1456 = vmatpush1.bf16.msra.mxu0 0
      %1457 = vmatprep.subr.bf16.mxu0 0
      %1458 = vmatpush1.bf16.msra.mxu0 0
      %1459 = vmatprep.subr.bf16.mxu0 0
      %1460 = vmatpush1.bf16.msra.mxu0 0
      %1461 = vmatprep.mubr.bf16.mxu0 0
      %1462 = vmatmul.mubr.bf16.gmra.mrb[0].mxu0 %v1428
      %v1463 = vpop.f32.mrb[0].mxu0
      %v1464 = vadd.f32 0.0, %v1463
      %v1465 = vpop.f32.mrb[0].mxu0
      %v1466 = vadd.f32 0.0, %v1465
      %v1467 = vpop.f32.mrb[0].mxu0
      %v1468 = vpop.f32.mrb[0].mxu0
      %1469 = vdwg.mxu0
      %1470 = vmatprep.subr.bf16.mxu0 %v539
      %1471 = vmatpush1.bf16.msra.mxu0 %v538
      %1472 = vmatprep.subr.bf16.mxu0 %v543
      %1473 = vmatpush1.bf16.msra.mxu0 %v542
      %1474 = vmatprep.subr.bf16.mxu0 %v547
      %1475 = vmatpush1.bf16.msra.mxu0 %v546
      %1476 = vmatprep.subr.bf16.mxu0 %v551
      %1477 = vmatpush1.bf16.msra.mxu0 %v550
      %1478 = vmatprep.subr.bf16.mxu0 %v555
      %1479 = vmatpush1.bf16.msra.mxu0 %v554
      %1480 = vmatprep.subr.bf16.mxu0 %v559
      %1481 = vmatpush1.bf16.msra.mxu0 %v558
      %1482 = vmatprep.subr.bf16.mxu0 %v563
      %1483 = vmatpush1.bf16.msra.mxu0 %v562
      %1484 = vmatprep.subr.bf16.mxu0 %v567
      %1485 = vmatpush1.bf16.msra.mxu0 %v566
      %1486 = vmatprep.subr.bf16.mxu0 0
      %1487 = vmatpush1.bf16.msra.mxu0 0
      %1488 = vmatprep.subr.bf16.mxu0 0
      %1489 = vmatpush1.bf16.msra.mxu0 0
      %1490 = vmatprep.subr.bf16.mxu0 0
      %1491 = vmatpush1.bf16.msra.mxu0 0
      %1492 = vmatprep.subr.bf16.mxu0 0
      %1493 = vmatpush1.bf16.msra.mxu0 0
      %1494 = vmatprep.subr.bf16.mxu0 0
      %1495 = vmatpush1.bf16.msra.mxu0 0
      %1496 = vmatprep.subr.bf16.mxu0 0
      %1497 = vmatpush1.bf16.msra.mxu0 0
      %1498 = vmatprep.subr.bf16.mxu0 0
      %1499 = vmatpush1.bf16.msra.mxu0 0
      %1500 = vmatprep.subr.bf16.mxu0 0
      %1501 = vmatpush1.bf16.msra.mxu0 0
      %1502 = vmatprep.mubr.bf16.mxu0 0
      %1503 = vmatmul.mubr.bf16.gmra.mrb[0].mxu0 %v1428
      %v1504 = vpop.f32.mrb[0].mxu0
      %v1505 = vadd.f32 0.0, %v1504
      %v1506 = vpop.f32.mrb[0].mxu0
      %v1507 = vadd.f32 0.0, %v1506
      %v1508 = vpop.f32.mrb[0].mxu0
      %v1509 = vpop.f32.mrb[0].mxu0
      %1510 = vdwg.mxu0
      %v1511 = vadd.f32 %v1424, %v1464
      %v1512 = vadd.f32 %v1425, %v1466
      %v1513 = vadd.f32 %v1426, %v1505
      %v1514 = vadd.f32 %v1427, %v1507
      %v1515 = vxor.u32 %v1511, 2147483648
      %v1516 = vxor.u32 %v1512, 2147483648
      %v1517 = vxor.u32 %v1513, 2147483648
      %v1518 = vmul.f32 %v1515, 1.442695
      %v1519 = vpow.pop %v1518
      %v1520 = vmul.f32 %v1516, 1.442695
      %v1521 = vpow.pop %v1520
      %v1522 = vmul.f32 %v1517, 1.442695
      %v1523 = vpow.pop %v1522
      %v1524 = vadd.f32 %v1519, 1.0
      %v1525 = vadd.f32 %v1521, 1.0
      %v1526 = vadd.f32 %v1523, 1.0
      %v1527 = vrcp.pop %v1524
      %v1528 = vmul.f32 1.0, %v1527
      %v1529 = vrcp.pop %v1525
      %v1530 = vmul.f32 1.0, %v1529
      %v1531 = vrcp.pop %v1526
      %v1532 = vmul.f32 1.0, %v1531
      %v1533 = vtanh.pop %v1514
      %v1534 = vmul.f32 %v1530, %v1421
      %v1535 = vmul.f32 %v1528, %v1533
      %v1536 = vadd.f32 %v1534, %v1535
      %v1537 = vtanh.pop %v1536
      %v1538 = vmul.f32 %v1532, %v1537
      %s1539 = sadd.s32 %s678, 7
      %p1540 = scmp.lt.s32.totalorder %s1539, 10
      %s1541 = scalar_select %p1540, 1, 0
      %v1542 = vstv %s1541
      %vm1543 = vcmp.eq.s32.totalorder %v1542, 1
      %v1544 = vsel %vm1543, %v1536, %v1421
      %v1545 = vsel %vm1543, %v1538, %v1422
      %1546 = vst [vmem:[#allocation2] sm:$0xff] %v1545
      %1547 = vst [vmem:[#allocation3] sm:$0xff] %v1544
      %p1548 = scmp.eq.s32.totalorder %s17, 1
      // Predicated region
      $region104: #{lstm_forward.1} parent=27 // pred_check
        %p1549 = pneg %p1548
      $region105: #{lstm_forward.1} parent=27 // pred_check_branch
        %1551 = sbr.rel (%p1549) target = $region107
      $region106: #{lstm_forward.1} parent=27 // pred_region
        %v1552 = vld [vmem:[#allocation5] sm:$0xff]
        %v1553 = vld [vmem:[#allocation5 + $0x8] sm:$0xff]
        %v1554 = vld [vmem:[#allocation5 + $0x10] sm:$0xff]
        %v1555 = vld [vmem:[#allocation5 + $0x18] sm:$0xff]
        %v1556 = vld [vmem:[#allocation5 + $0x20] sm:$0xff]
        %v1557 = vld [vmem:[#allocation5 + $0x28] sm:$0xff]
        %v1558 = vld [vmem:[#allocation5 + $0x30] sm:$0xff]
        %v1559 = vld [vmem:[#allocation5 + $0x38] sm:$0xff]
        %v1560 = vld [vmem:[#allocation5 + $0x40] sm:$0xff]
        %v1561 = vld [vmem:[#allocation5 + $0x48] sm:$0xff]
        %v1562 = vld [vmem:[#allocation5 + $0x50] sm:$0xff]
        %v1563 = vld [vmem:[#allocation5 + $0x58] sm:$0xff]
        %v1564 = vld [vmem:[#allocation5 + $0x60] sm:$0xff]
        %v1565 = vld [vmem:[#allocation5 + $0x68] sm:$0xff]
        %v1566 = vld [vmem:[#allocation5 + $0x70] sm:$0xff]
        %v1567 = vld [vmem:[#allocation5 + $0x78] sm:$0xff]
        %v1568 = vld [vmem:[#allocation7] sm:$0x1]
        %v1570 = vlaneseq
        %v1571 = vshrl.u32 %v1570, 7
        %v1572 = vsub.s32 0, %v1571
        %v1573 = vrot.slane %v1568, %v1572
        %1575 = vmatprep.subr.mxu0 0.0
        %1576 = vmatpush1.msra.mxu0 %v1552
        %1577 = vmatprep.subr.mxu0 0.0
        %1578 = vmatpush1.msra.mxu0 %v1553
        %1579 = vmatprep.subr.mxu0 0.0
        %1580 = vmatpush1.msra.mxu0 %v1554
        %1581 = vmatprep.subr.mxu0 0.0
        %1582 = vmatpush1.msra.mxu0 %v1555
        %1583 = vmatprep.subr.mxu0 0.0
        %1584 = vmatpush1.msra.mxu0 %v1556
        %1585 = vmatprep.subr.mxu0 0.0
        %1586 = vmatpush1.msra.mxu0 %v1557
        %1587 = vmatprep.subr.mxu0 0.0
        %1588 = vmatpush1.msra.mxu0 %v1558
        %1589 = vmatprep.subr.mxu0 0.0
        %1590 = vmatpush1.msra.mxu0 %v1559
        %1591 = vmatprep.subr.mxu0 0.0
        %1592 = vmatpush1.msra.mxu0 %v1560
        %1593 = vmatprep.subr.mxu0 0.0
        %1594 = vmatpush1.msra.mxu0 %v1561
        %1595 = vmatprep.subr.mxu0 0.0
        %1596 = vmatpush1.msra.mxu0 %v1562
        %1597 = vmatprep.subr.mxu0 0.0
        %1598 = vmatpush1.msra.mxu0 %v1563
        %1599 = vmatprep.subr.mxu0 0.0
        %1600 = vmatpush1.msra.mxu0 %v1564
        %1601 = vmatprep.subr.mxu0 0.0
        %1602 = vmatpush1.msra.mxu0 %v1565
        %1603 = vmatprep.subr.mxu0 0.0
        %1604 = vmatpush1.msra.mxu0 %v1566
        %1605 = vmatprep.subr.mxu0 0.0
        %1606 = vmatpush1.msra.mxu0 %v1567
        %1607 = vmatprep.subr.mxu0 0.0
        %1608 = vmatpush1.msra.mxu0 0.0
        %1609 = vmatprep.subr.mxu0 0.0
        %1610 = vmatpush1.msra.mxu0 0.0
        %1611 = vmatprep.subr.mxu0 0.0
        %1612 = vmatpush1.msra.mxu0 0.0
        %1613 = vmatprep.subr.mxu0 0.0
        %1614 = vmatpush1.msra.mxu0 0.0
        %1615 = vmatprep.subr.mxu0 0.0
        %1616 = vmatpush1.msra.mxu0 0.0
        %1617 = vmatprep.subr.mxu0 0.0
        %1618 = vmatpush1.msra.mxu0 0.0
        %1619 = vmatprep.subr.mxu0 0.0
        %1620 = vmatpush1.msra.mxu0 0.0
        %1621 = vmatprep.subr.mxu0 0.0
        %1622 = vmatpush1.msra.mxu0 0.0
        %1623 = vmatprep.subr.mxu0 0.0
        %1624 = vmatpush1.msra.mxu0 0.0
        %1625 = vmatprep.subr.mxu0 0.0
        %1626 = vmatpush1.msra.mxu0 0.0
        %1627 = vmatprep.subr.mxu0 0.0
        %1628 = vmatpush1.msra.mxu0 0.0
        %1629 = vmatprep.subr.mxu0 0.0
        %1630 = vmatpush1.msra.mxu0 0.0
        %1631 = vmatprep.subr.mxu0 0.0
        %1632 = vmatpush1.msra.mxu0 0.0
        %1633 = vmatprep.subr.mxu0 0.0
        %1634 = vmatpush1.msra.mxu0 0.0
        %1635 = vmatprep.subr.mxu0 0.0
        %1636 = vmatpush1.msra.mxu0 0.0
        %1637 = vmatprep.subr.mxu0 0.0
        %1638 = vmatpush1.msra.mxu0 0.0
        %1639 = vmatprep.mubr.f32.mxu0 0.0
        %1640 = vmatmul.mubr.f32.gmra.mrb[0].mxu0 %v1545
        %v1641 = vpop.f32.mrb[0].mxu0
        %v1642 = vadd.f32 %v1573, %v1641
        %v1643 = vpop.f32.mrb[0].mxu0
        %1644 = vdwg.mxu0
        %vm1645 = vcmask 7168
        %1646 = vst.msk [vmem:[%s4] sm:$0xff] %vm1645, %v1642
      $region107: #{lstm_forward.1} parent=27 // pred_fallthru
        _
      // Predicated region
      $region108: #{lstm_forward.1} parent=27 // pred_check
        %p1647 = pneg %p77
      $region109: #{lstm_forward.1} parent=27 // pred_check_branch
        %1649 = sbr.rel (%p1647) target = $region111
      $region110: #{lstm_forward.1} parent=27 // pred_region
        _
      $region111: #{lstm_forward.1} parent=27 // pred_fallthru
        _
      // Predicated region
      $region112: #{lstm_forward.1} parent=27 // pred_check
        %p1650 = pneg %p77
      $region113: #{lstm_forward.1} parent=27 // pred_check_branch
        %1652 = sbr.rel (%p1650) target = $region115
      $region114: #{lstm_forward.1} parent=27 // pred_region
        _
      $region115: #{lstm_forward.1} parent=27 // pred_fallthru
        _
    $region28: #{lstm_forward.1} parent=5 // pred_fallthru
      _
    %p1653 = scmp.le.s32.totalorder 2, %s12
    // Predicated region
    $region116: #{lstm_forward.1} parent=5 // pred_check
      %p1654 = pneg %p1653
    $region117: #{lstm_forward.1} parent=5 // pred_check_branch
      %1656 = sbr.rel (%p1654) target = $region119
    $region118: #{lstm_forward.1} parent=5 // pred_region
      %s1657 = ssub.s32 %s12, 2
    $region119: #{lstm_forward.1} parent=5 // pred_fallthru
      _
  $region6: #{lstm_forward.1} parent=0 // loop_footer
    %s16 = sadd.s32 1, %s12
  $region7: #{lstm_forward.1} parent=0 // loop_footer_branch
    %11 = sbr.rel target = $region3
  $region8: #{lstm_forward.1} parent=0 // loop_exit
    _
  %1658 = vsyncmov [#allocation6]
  %s1659 = vpop.sfrf %1658
  %p1660 = scmp.eq.s32.totalorder %s1659, 0
  %p1661 = pneg %p1660
  %1663 = shalt.err (%p1661)
  %s1664 = scalar_lea.sflag [#allocation6], 1
  %1665 = vsyncmov %s1664
  %s1666 = vpop.sfrf %1665
  %p1667 = scmp.eq.s32.totalorder %s1666, 0
  %p1668 = pneg %p1667
  %1670 = shalt.err (%p1668)

</llo_original>
